<compile_context>
chip_gen: v7x
topology: tpu7x:2x2x1
jax: 0.10.0
libtpu: 0.0.40
codegen_flags: <defaults>
</compile_context>

<pallas_src>
import math
from functools import partial

import jax
import jax.numpy as jnp
from jax.experimental import pallas as pl
from jax.experimental.pallas import tpu as pltpu

LN_EPS = 1e-5  # nn.LayerNorm default


# --------------------------- Fused forward kernel -----------------------------
def _fused_gather_kernel(x_ref, qh_ref, g_ref, b_ref, wkv_ref, bkv_ref,
                         wo_ref, bo_ref, o_ref, *, scale):
    """One grid step == one batch element.

    x_ref   : [1, S, D]   flattened node representations (this batch)
    qh_ref  : [H, L, dh]  pre-projected, head-split queries (batch-invariant)
    g_ref   : [1, D]      norm_nodes gamma
    b_ref   : [1, D]      norm_nodes beta
    wkv_ref : [D, 2D]     concat(Wk^T, Wv^T)
    bkv_ref : [1, 2D]     concat(bk, bv)
    wo_ref  : [H, dh, D]  out_proj weight, transposed and split per head
    bo_ref  : [1, D]      out_proj bias
    o_ref   : [1, L, D]   fused output (this batch)
    """
    D = x_ref.shape[-1]
    H, L, dh = qh_ref.shape

    # --- LayerNorm over the node features (fused, no HBM writeback of k/v) ---
    x = x_ref[0].astype(jnp.float32)                                  # [S, D]
    mean = jnp.mean(x, axis=-1, keepdims=True)
    var = jnp.mean(jnp.square(x - mean), axis=-1, keepdims=True)
    kn = (x - mean) * jax.lax.rsqrt(var + LN_EPS)
    kn = kn * g_ref[...] + b_ref[...]                                 # [S, D]

    # --- merged K/V projection: a single [S, D] @ [D, 2D] MXU matmul ---
    kv = jnp.dot(kn, wkv_ref[...],
                 preferred_element_type=jnp.float32) + bkv_ref[...]   # [S, 2D]

    # --- per-head attention with the output projection folded in (unrolled) ---
    acc = None
    for h in range(H):
        q_h = qh_ref[h]                                               # [L, dh]
        k_h = kv[:, h * dh:(h + 1) * dh]                              # [S, dh]
        v_h = kv[:, D + h * dh:D + (h + 1) * dh]                      # [S, dh]

        # scores = q_h @ k_h^T (contract last dims; no explicit transpose)
        s = jax.lax.dot_general(q_h, k_h, (((1,), (1,)), ((), ())),
                                preferred_element_type=jnp.float32) * scale  # [L, S]
        s = s - jnp.max(s, axis=-1, keepdims=True)
        p = jnp.exp(s)
        # reciprocal on the EUP slot instead of a VALU divide
        p = p * pl.reciprocal(jnp.sum(p, axis=-1, keepdims=True), approx=True)

        o_h = jnp.dot(p, v_h, preferred_element_type=jnp.float32)     # [L, dh]
        c = jnp.dot(o_h, wo_ref[h], preferred_element_type=jnp.float32)  # [L, D]
        acc = c if acc is None else acc + c

    o_ref[0] = (acc + bo_ref[...]).astype(o_ref.dtype)


# --------------------------- Positional queries (host/XLA) --------------------
def _positional_queries(seq_len, D):
    position = jnp.arange(seq_len, dtype=jnp.float32)[:, None]
    div_term = jnp.exp(jnp.arange(0, D, 2, dtype=jnp.float32) * (-math.log(10000.0) / D))
    pe = jnp.zeros((seq_len, D), dtype=jnp.float32)
    pe = pe.at[:, 0::2].set(jnp.sin(position * div_term))
    pe = pe.at[:, 1::2].set(jnp.cos(position * div_term))
    return pe                                                         # [L, D]


# ------------------------------ Full forward ----------------------------------
def cross_attention_gather(node_repr, seq_len, params, num_heads):
    B, N, P, D = node_repr.shape
    S = N * P
    L = seq_len
    dh = D // num_heads

    # ---- batch/data-invariant query path, hoisted out of the Pallas kernel ----
    # (positional encoding -> norm_queries -> Q projection -> head split).
    # Under jit this is a pure function of the parameters and constant-folds.
    pe = _positional_queries(L, D)                                    # [L, D]
    m = jnp.mean(pe, axis=-1, keepdims=True)
    v = jnp.mean(jnp.square(pe - m), axis=-1, keepdims=True)
    qn = (pe - m) * jax.lax.rsqrt(v + LN_EPS) * params["ln_q_g"] + params["ln_q_b"]
    wq = params["in_proj_w"][:D]
    bq = params["in_proj_b"][:D]
    qp = qn @ wq.T + bq                                               # [L, D]
    qh = qp.reshape(L, num_heads, dh).transpose(1, 0, 2)              # [H, L, dh]

    # ---- merged K/V projection weights (k and v share the same input) ----
    wk = params["in_proj_w"][D:2 * D]
    wv = params["in_proj_w"][2 * D:]
    bk = params["in_proj_b"][D:2 * D]
    bv = params["in_proj_b"][2 * D:]
    wkv = jnp.concatenate([wk.T, wv.T], axis=1)                       # [D, 2D]
    bkv = jnp.concatenate([bk, bv])[None]                             # [1, 2D]

    # out_proj folded per head: out = sum_h o_h @ Wo^T[h*dh:(h+1)*dh, :] + bo
    wo_h = params["out_proj_w"].T.reshape(num_heads, dh, D)           # [H, dh, D]
    bo = params["out_proj_b"][None]                                   # [1, D]

    flat = node_repr.reshape(B, S, D)

    # TODO(synk): at realistic sizes (large S = N*P) the node axis should get its
    # own tiled grid dimension so BlockSpec can double-buffer against HBM.
    return pl.pallas_call(
        partial(_fused_gather_kernel, scale=1.0 / math.sqrt(dh)),
        out_shape=jax.ShapeDtypeStruct((B, L, D), jnp.float32),
        grid=(B,),
        in_specs=[
            pl.BlockSpec((1, S, D), lambda b: (b, 0, 0)),             # nodes
            pl.BlockSpec((num_heads, L, dh), lambda b: (0, 0, 0)),    # qh (const)
            pl.BlockSpec((1, D), lambda b: (0, 0)),                   # ln gamma
            pl.BlockSpec((1, D), lambda b: (0, 0)),                   # ln beta
            pl.BlockSpec((D, 2 * D), lambda b: (0, 0)),               # Wkv
            pl.BlockSpec((1, 2 * D), lambda b: (0, 0)),               # bkv
            pl.BlockSpec((num_heads, dh, D), lambda b: (0, 0, 0)),    # Wo per head
            pl.BlockSpec((1, D), lambda b: (0, 0)),                   # bo
        ],
        out_specs=pl.BlockSpec((1, L, D), lambda b: (b, 0, 0)),
        compiler_params=pltpu.CompilerParams(dimension_semantics=("parallel",)),
    )(flat, qh, params["ln_nodes_g"][None], params["ln_nodes_b"][None],
      wkv, bkv, wo_h, bo)


# ------------------------------ Pure-JAX reference -----------------------------
def reference_forward(node_repr, seq_len, params, num_heads):
    B, N, P, D = node_repr.shape
    S = N * P
    dh = D // num_heads

    def ln(x, g, b):
        m = jnp.mean(x, axis=-1, keepdims=True)
        var = jnp.mean(jnp.square(x - m), axis=-1, keepdims=True)
        return (x - m) * jax.lax.rsqrt(var + LN_EPS) * g + b

    flat = node_repr.reshape(B, S, D)
    k = ln(flat, params["ln_nodes_g"], params["ln_nodes_b"])
    v = k
    q = jnp.broadcast_to(_positional_queries(seq_len, D)[None], (B, seq_len, D))
    q = ln(q, params["ln_q_g"], params["ln_q_b"])

    w_in, b_in = params["in_proj_w"], params["in_proj_b"]
    wq, wk, wv = w_in[:D], w_in[D:2 * D], w_in[2 * D:]
    bq, bk, bv = b_in[:D], b_in[D:2 * D], b_in[2 * D:]
    qp, kp, vp = q @ wq.T + bq, k @ wk.T + bk, v @ wv.T + bv

    def sh(x):
        Bx, Tx, _ = x.shape
        return x.reshape(Bx, Tx, num_heads, dh).transpose(0, 2, 1, 3)

    qh, kh, vh = sh(qp), sh(kp), sh(vp)
    s = jnp.einsum("bhld,bhsd->bhls", qh, kh) / math.sqrt(dh)
    p = jax.nn.softmax(s, axis=-1)
    o = jnp.einsum("bhls,bhsd->bhld", p, vh)
    o = o.transpose(0, 2, 1, 3).reshape(B, seq_len, D)
    return o @ params["out_proj_w"].T + params["out_proj_b"]


# ------------------------------------ main -------------------------------------
if __name__ == "__main__":
    B, N, P, D = 2, 2, 4, 32
    num_heads = 8
    seq_len = 8

    key = jax.random.PRNGKey(0)
    k_x, k_w, k_ow, k_g1, k_b1, k_g2, k_b2 = jax.random.split(key, 7)

    node_repr = jax.random.normal(k_x, (B, N, P, D), dtype=jnp.float32)

    # Deterministic synthetic parameters (shapes match nn.MultiheadAttention / LayerNorm).
    params = {
        "in_proj_w": 0.1 * jax.random.normal(k_w, (3 * D, D), dtype=jnp.float32),
        "in_proj_b": jnp.zeros((3 * D,), dtype=jnp.float32),
        "out_proj_w": 0.1 * jax.random.normal(k_ow, (D, D), dtype=jnp.float32),
        "out_proj_b": jnp.zeros((D,), dtype=jnp.float32),
        "ln_nodes_g": 1.0 + 0.05 * jax.random.normal(k_g1, (D,), dtype=jnp.float32),
        "ln_nodes_b": 0.05 * jax.random.normal(k_b1, (D,), dtype=jnp.float32),
        "ln_q_g": 1.0 + 0.05 * jax.random.normal(k_g2, (D,), dtype=jnp.float32),
        "ln_q_b": 0.05 * jax.random.normal(k_b2, (D,), dtype=jnp.float32),
    }

    fwd = jax.jit(cross_attention_gather, static_argnums=(1, 3))
    out = fwd(node_repr, seq_len, params, num_heads)
    out = jax.block_until_ready(out)
    assert out.shape == (B, seq_len, D), out.shape

    ref = reference_forward(node_repr, seq_len, params, num_heads)
    ref = jax.block_until_ready(ref)
    # Tolerance relaxed from 1e-4: softmax normalization uses the EUP approximate
    # reciprocal (pl.reciprocal(..., approx=True)) inside the kernel.
    assert jnp.allclose(out, ref, rtol=2e-3, atol=2e-3), float(jnp.max(jnp.abs(out - ref)))

    print("KERNEL_OK")
</pallas_src>

<mosaic_0001>
module attributes {stable_mosaic.version = 11 : i64} {
  func.func @_fused_gather_kernel(%arg0: i32, %arg1: memref<1x8x32xf32, #tpu.memory_space<vmem>>, %arg2: memref<8x8x4xf32, #tpu.memory_space<vmem>>, %arg3: memref<1x32xf32, #tpu.memory_space<vmem>>, %arg4: memref<1x32xf32, #tpu.memory_space<vmem>>, %arg5: memref<32x64xf32, #tpu.memory_space<vmem>>, %arg6: memref<1x64xf32, #tpu.memory_space<vmem>>, %arg7: memref<8x4x32xf32, #tpu.memory_space<vmem>>, %arg8: memref<1x32xf32, #tpu.memory_space<vmem>>, %arg9: memref<1x8x32xf32, #tpu.memory_space<vmem>>) attributes {dimension_semantics = [#tpu.dimension_semantics<parallel>], iteration_bounds = array<i64: 2>, scalar_prefetch = 0 : i64, scratch_operands = 0 : i64, tpu.core_type = #tpu.core_type<tc>, window_params = [{transform_indices = @transform_0, window_bounds = array<i64: 1, 8, 32>}, {pipeline_mode = #tpu.pipeline_mode<synchronous>, transform_indices = @transform_1, window_bounds = array<i64: 8, 8, 4>}, {pipeline_mode = #tpu.pipeline_mode<synchronous>, transform_indices = @transform_2, window_bounds = array<i64: 1, 32>}, {pipeline_mode = #tpu.pipeline_mode<synchronous>, transform_indices = @transform_3, window_bounds = array<i64: 1, 32>}, {pipeline_mode = #tpu.pipeline_mode<synchronous>, transform_indices = @transform_4, window_bounds = array<i64: 32, 64>}, {pipeline_mode = #tpu.pipeline_mode<synchronous>, transform_indices = @transform_5, window_bounds = array<i64: 1, 64>}, {pipeline_mode = #tpu.pipeline_mode<synchronous>, transform_indices = @transform_6, window_bounds = array<i64: 8, 4, 32>}, {pipeline_mode = #tpu.pipeline_mode<synchronous>, transform_indices = @transform_7, window_bounds = array<i64: 1, 32>}, {transform_indices = @transform_8, window_bounds = array<i64: 1, 8, 32>}]} {
    %c0 = arith.constant 0 : index
    %c0_0 = arith.constant 0 : index
    %c0_1 = arith.constant 0 : index
    %0 = vector.load %arg1[%c0, %c0_0, %c0_1] : memref<1x8x32xf32, #tpu.memory_space<vmem>>, vector<1x8x32xf32>
    %1 = vector.shape_cast %0 : vector<1x8x32xf32> to vector<8x32xf32>
    %cst = arith.constant dense<0.000000e+00> : vector<8xf32>
    %2 = vector.multi_reduction <add>, %1, %cst [1] : vector<8x32xf32> to vector<8xf32>
    %3 = vector.shape_cast %2 : vector<8xf32> to vector<8x1xf32>
    %cst_2 = arith.constant 3.200000e+01 : f32
    %4 = vector.broadcast %cst_2 : f32 to vector<8x1xf32>
    %5 = arith.divf %3, %4 : vector<8x1xf32>
    %6 = vector.broadcast %5 : vector<8x1xf32> to vector<8x32xf32>
    %7 = arith.subf %1, %6 : vector<8x32xf32>
    %8 = arith.mulf %7, %7 : vector<8x32xf32>
    %cst_3 = arith.constant dense<0.000000e+00> : vector<8xf32>
    %9 = vector.multi_reduction <add>, %8, %cst_3 [1] : vector<8x32xf32> to vector<8xf32>
    %10 = vector.shape_cast %9 : vector<8xf32> to vector<8x1xf32>
    %cst_4 = arith.constant 3.200000e+01 : f32
    %11 = vector.broadcast %cst_4 : f32 to vector<8x1xf32>
    %12 = arith.divf %10, %11 : vector<8x1xf32>
    %13 = vector.broadcast %5 : vector<8x1xf32> to vector<8x32xf32>
    %14 = arith.subf %1, %13 : vector<8x32xf32>
    %cst_5 = arith.constant 9.99999974E-6 : f32
    %15 = vector.broadcast %cst_5 : f32 to vector<8x1xf32>
    %16 = arith.addf %12, %15 : vector<8x1xf32>
    %17 = math.rsqrt %16 : vector<8x1xf32>
    %18 = vector.broadcast %17 : vector<8x1xf32> to vector<8x32xf32>
    %19 = arith.mulf %14, %18 : vector<8x32xf32>
    %c0_6 = arith.constant 0 : index
    %c0_7 = arith.constant 0 : index
    %20 = vector.load %arg3[%c0_6, %c0_7] : memref<1x32xf32, #tpu.memory_space<vmem>>, vector<1x32xf32>
    %21 = vector.broadcast %20 : vector<1x32xf32> to vector<8x32xf32>
    %22 = arith.mulf %19, %21 : vector<8x32xf32>
    %c0_8 = arith.constant 0 : index
    %c0_9 = arith.constant 0 : index
    %23 = vector.load %arg4[%c0_8, %c0_9] : memref<1x32xf32, #tpu.memory_space<vmem>>, vector<1x32xf32>
    %24 = vector.broadcast %23 : vector<1x32xf32> to vector<8x32xf32>
    %25 = arith.addf %22, %24 : vector<8x32xf32>
    %c0_10 = arith.constant 0 : index
    %c0_11 = arith.constant 0 : index
    %26 = vector.load %arg5[%c0_10, %c0_11] : memref<32x64xf32, #tpu.memory_space<vmem>>, vector<32x64xf32>
    %cst_12 = arith.constant dense<0.000000e+00> : vector<8x64xf32>
    %27 = tpu.matmul %25, %26, %cst_12 {dimension_numbers = #tpu.dot_dimension_numbers<[1], [0], [0], [1], [0, 0, 1, 1], [], []>} : vector<8x32xf32>, vector<32x64xf32>, vector<8x64xf32> -> vector<8x64xf32>
    %c0_13 = arith.constant 0 : index
    %c0_14 = arith.constant 0 : index
    %28 = vector.load %arg6[%c0_13, %c0_14] : memref<1x64xf32, #tpu.memory_space<vmem>>, vector<1x64xf32>
    %29 = vector.broadcast %28 : vector<1x64xf32> to vector<8x64xf32>
    %30 = arith.addf %27, %29 : vector<8x64xf32>
    %c0_15 = arith.constant 0 : index
    %c0_16 = arith.constant 0 : index
    %c0_17 = arith.constant 0 : index
    %31 = vector.load %arg2[%c0_15, %c0_16, %c0_17] : memref<8x8x4xf32, #tpu.memory_space<vmem>>, vector<1x8x4xf32>
    %32 = vector.shape_cast %31 : vector<1x8x4xf32> to vector<8x4xf32>
    %33 = vector.extract_strided_slice %30 {offsets = [0, 0], sizes = [8, 4], strides = [1, 1]} : vector<8x64xf32> to vector<8x4xf32>
    %34 = vector.extract_strided_slice %30 {offsets = [0, 32], sizes = [8, 4], strides = [1, 1]} : vector<8x64xf32> to vector<8x4xf32>
    %cst_18 = arith.constant dense<0.000000e+00> : vector<8x8xf32>
    %35 = tpu.matmul %32, %33, %cst_18 {dimension_numbers = #tpu.dot_dimension_numbers<[1], [1], [0], [0], [0, 0, 1, 0], [], []>} : vector<8x4xf32>, vector<8x4xf32>, vector<8x8xf32> -> vector<8x8xf32>
    %cst_19 = arith.constant 5.000000e-01 : f32
    %36 = vector.broadcast %cst_19 : f32 to vector<8x8xf32>
    %37 = arith.mulf %35, %36 : vector<8x8xf32>
    %cst_20 = arith.constant dense<0xFF800000> : vector<8xf32>
    %38 = vector.multi_reduction <maximumf>, %37, %cst_20 [1] : vector<8x8xf32> to vector<8xf32>
    %39 = vector.shape_cast %38 : vector<8xf32> to vector<8x1xf32>
    %40 = vector.broadcast %39 : vector<8x1xf32> to vector<8x8xf32>
    %41 = arith.subf %37, %40 : vector<8x8xf32>
    %42 = math.exp %41 : vector<8x8xf32>
    %cst_21 = arith.constant dense<0.000000e+00> : vector<8xf32>
    %43 = vector.multi_reduction <add>, %42, %cst_21 [1] : vector<8x8xf32> to vector<8xf32>
    %44 = vector.shape_cast %43 : vector<8xf32> to vector<8x1xf32>
    %45 = tpu.reciprocal %44 {approx = true} : vector<8x1xf32> -> vector<8x1xf32>
    %46 = vector.broadcast %45 : vector<8x1xf32> to vector<8x8xf32>
    %47 = arith.mulf %42, %46 : vector<8x8xf32>
    %cst_22 = arith.constant dense<0.000000e+00> : vector<8x4xf32>
    %48 = tpu.matmul %47, %34, %cst_22 {dimension_numbers = #tpu.dot_dimension_numbers<[1], [0], [0], [1], [0, 0, 1, 1], [], []>} : vector<8x8xf32>, vector<8x4xf32>, vector<8x4xf32> -> vector<8x4xf32>
    %c0_23 = arith.constant 0 : index
    %c0_24 = arith.constant 0 : index
    %c0_25 = arith.constant 0 : index
    %49 = vector.load %arg7[%c0_23, %c0_24, %c0_25] : memref<8x4x32xf32, #tpu.memory_space<vmem>>, vector<1x4x32xf32>
    %50 = vector.shape_cast %49 : vector<1x4x32xf32> to vector<4x32xf32>
    %cst_26 = arith.constant dense<0.000000e+00> : vector<8x32xf32>
    %51 = tpu.matmul %48, %50, %cst_26 {dimension_numbers = #tpu.dot_dimension_numbers<[1], [0], [0], [1], [0, 0, 1, 1], [], []>} : vector<8x4xf32>, vector<4x32xf32>, vector<8x32xf32> -> vector<8x32xf32>
    %c1 = arith.constant 1 : index
    %c0_27 = arith.constant 0 : index
    %c0_28 = arith.constant 0 : index
    %52 = vector.load %arg2[%c1, %c0_27, %c0_28] : memref<8x8x4xf32, #tpu.memory_space<vmem>>, vector<1x8x4xf32>
    %53 = vector.shape_cast %52 : vector<1x8x4xf32> to vector<8x4xf32>
    %54 = vector.extract_strided_slice %30 {offsets = [0, 4], sizes = [8, 4], strides = [1, 1]} : vector<8x64xf32> to vector<8x4xf32>
    %55 = vector.extract_strided_slice %30 {offsets = [0, 36], sizes = [8, 4], strides = [1, 1]} : vector<8x64xf32> to vector<8x4xf32>
    %cst_29 = arith.constant dense<0.000000e+00> : vector<8x8xf32>
    %56 = tpu.matmul %53, %54, %cst_29 {dimension_numbers = #tpu.dot_dimension_numbers<[1], [1], [0], [0], [0, 0, 1, 0], [], []>} : vector<8x4xf32>, vector<8x4xf32>, vector<8x8xf32> -> vector<8x8xf32>
    %cst_30 = arith.constant 5.000000e-01 : f32
    %57 = vector.broadcast %cst_30 : f32 to vector<8x8xf32>
    %58 = arith.mulf %56, %57 : vector<8x8xf32>
    %cst_31 = arith.constant dense<0xFF800000> : vector<8xf32>
    %59 = vector.multi_reduction <maximumf>, %58, %cst_31 [1] : vector<8x8xf32> to vector<8xf32>
    %60 = vector.shape_cast %59 : vector<8xf32> to vector<8x1xf32>
    %61 = vector.broadcast %60 : vector<8x1xf32> to vector<8x8xf32>
    %62 = arith.subf %58, %61 : vector<8x8xf32>
    %63 = math.exp %62 : vector<8x8xf32>
    %cst_32 = arith.constant dense<0.000000e+00> : vector<8xf32>
    %64 = vector.multi_reduction <add>, %63, %cst_32 [1] : vector<8x8xf32> to vector<8xf32>
    %65 = vector.shape_cast %64 : vector<8xf32> to vector<8x1xf32>
    %66 = tpu.reciprocal %65 {approx = true} : vector<8x1xf32> -> vector<8x1xf32>
    %67 = vector.broadcast %66 : vector<8x1xf32> to vector<8x8xf32>
    %68 = arith.mulf %63, %67 : vector<8x8xf32>
    %cst_33 = arith.constant dense<0.000000e+00> : vector<8x4xf32>
    %69 = tpu.matmul %68, %55, %cst_33 {dimension_numbers = #tpu.dot_dimension_numbers<[1], [0], [0], [1], [0, 0, 1, 1], [], []>} : vector<8x8xf32>, vector<8x4xf32>, vector<8x4xf32> -> vector<8x4xf32>
    %c1_34 = arith.constant 1 : index
    %c0_35 = arith.constant 0 : index
    %c0_36 = arith.constant 0 : index
    %70 = vector.load %arg7[%c1_34, %c0_35, %c0_36] : memref<8x4x32xf32, #tpu.memory_space<vmem>>, vector<1x4x32xf32>
    %71 = vector.shape_cast %70 : vector<1x4x32xf32> to vector<4x32xf32>
    %cst_37 = arith.constant dense<0.000000e+00> : vector<8x32xf32>
    %72 = tpu.matmul %69, %71, %cst_37 {dimension_numbers = #tpu.dot_dimension_numbers<[1], [0], [0], [1], [0, 0, 1, 1], [], []>} : vector<8x4xf32>, vector<4x32xf32>, vector<8x32xf32> -> vector<8x32xf32>
    %73 = arith.addf %51, %72 : vector<8x32xf32>
    %c2 = arith.constant 2 : index
    %c0_38 = arith.constant 0 : index
    %c0_39 = arith.constant 0 : index
    %74 = vector.load %arg2[%c2, %c0_38, %c0_39] : memref<8x8x4xf32, #tpu.memory_space<vmem>>, vector<1x8x4xf32>
    %75 = vector.shape_cast %74 : vector<1x8x4xf32> to vector<8x4xf32>
    %76 = vector.extract_strided_slice %30 {offsets = [0, 8], sizes = [8, 4], strides = [1, 1]} : vector<8x64xf32> to vector<8x4xf32>
    %77 = vector.extract_strided_slice %30 {offsets = [0, 40], sizes = [8, 4], strides = [1, 1]} : vector<8x64xf32> to vector<8x4xf32>
    %cst_40 = arith.constant dense<0.000000e+00> : vector<8x8xf32>
    %78 = tpu.matmul %75, %76, %cst_40 {dimension_numbers = #tpu.dot_dimension_numbers<[1], [1], [0], [0], [0, 0, 1, 0], [], []>} : vector<8x4xf32>, vector<8x4xf32>, vector<8x8xf32> -> vector<8x8xf32>
    %cst_41 = arith.constant 5.000000e-01 : f32
    %79 = vector.broadcast %cst_41 : f32 to vector<8x8xf32>
    %80 = arith.mulf %78, %79 : vector<8x8xf32>
    %cst_42 = arith.constant dense<0xFF800000> : vector<8xf32>
    %81 = vector.multi_reduction <maximumf>, %80, %cst_42 [1] : vector<8x8xf32> to vector<8xf32>
    %82 = vector.shape_cast %81 : vector<8xf32> to vector<8x1xf32>
    %83 = vector.broadcast %82 : vector<8x1xf32> to vector<8x8xf32>
    %84 = arith.subf %80, %83 : vector<8x8xf32>
    %85 = math.exp %84 : vector<8x8xf32>
    %cst_43 = arith.constant dense<0.000000e+00> : vector<8xf32>
    %86 = vector.multi_reduction <add>, %85, %cst_43 [1] : vector<8x8xf32> to vector<8xf32>
    %87 = vector.shape_cast %86 : vector<8xf32> to vector<8x1xf32>
    %88 = tpu.reciprocal %87 {approx = true} : vector<8x1xf32> -> vector<8x1xf32>
    %89 = vector.broadcast %88 : vector<8x1xf32> to vector<8x8xf32>
    %90 = arith.mulf %85, %89 : vector<8x8xf32>
    %cst_44 = arith.constant dense<0.000000e+00> : vector<8x4xf32>
    %91 = tpu.matmul %90, %77, %cst_44 {dimension_numbers = #tpu.dot_dimension_numbers<[1], [0], [0], [1], [0, 0, 1, 1], [], []>} : vector<8x8xf32>, vector<8x4xf32>, vector<8x4xf32> -> vector<8x4xf32>
    %c2_45 = arith.constant 2 : index
    %c0_46 = arith.constant 0 : index
    %c0_47 = arith.constant 0 : index
    %92 = vector.load %arg7[%c2_45, %c0_46, %c0_47] : memref<8x4x32xf32, #tpu.memory_space<vmem>>, vector<1x4x32xf32>
    %93 = vector.shape_cast %92 : vector<1x4x32xf32> to vector<4x32xf32>
    %cst_48 = arith.constant dense<0.000000e+00> : vector<8x32xf32>
    %94 = tpu.matmul %91, %93, %cst_48 {dimension_numbers = #tpu.dot_dimension_numbers<[1], [0], [0], [1], [0, 0, 1, 1], [], []>} : vector<8x4xf32>, vector<4x32xf32>, vector<8x32xf32> -> vector<8x32xf32>
    %95 = arith.addf %73, %94 : vector<8x32xf32>
    %c3 = arith.constant 3 : index
    %c0_49 = arith.constant 0 : index
    %c0_50 = arith.constant 0 : index
    %96 = vector.load %arg2[%c3, %c0_49, %c0_50] : memref<8x8x4xf32, #tpu.memory_space<vmem>>, vector<1x8x4xf32>
    %97 = vector.shape_cast %96 : vector<1x8x4xf32> to vector<8x4xf32>
    %98 = vector.extract_strided_slice %30 {offsets = [0, 12], sizes = [8, 4], strides = [1, 1]} : vector<8x64xf32> to vector<8x4xf32>
    %99 = vector.extract_strided_slice %30 {offsets = [0, 44], sizes = [8, 4], strides = [1, 1]} : vector<8x64xf32> to vector<8x4xf32>
    %cst_51 = arith.constant dense<0.000000e+00> : vector<8x8xf32>
    %100 = tpu.matmul %97, %98, %cst_51 {dimension_numbers = #tpu.dot_dimension_numbers<[1], [1], [0], [0], [0, 0, 1, 0], [], []>} : vector<8x4xf32>, vector<8x4xf32>, vector<8x8xf32> -> vector<8x8xf32>
    %cst_52 = arith.constant 5.000000e-01 : f32
    %101 = vector.broadcast %cst_52 : f32 to vector<8x8xf32>
    %102 = arith.mulf %100, %101 : vector<8x8xf32>
    %cst_53 = arith.constant dense<0xFF800000> : vector<8xf32>
    %103 = vector.multi_reduction <maximumf>, %102, %cst_53 [1] : vector<8x8xf32> to vector<8xf32>
    %104 = vector.shape_cast %103 : vector<8xf32> to vector<8x1xf32>
    %105 = vector.broadcast %104 : vector<8x1xf32> to vector<8x8xf32>
    %106 = arith.subf %102, %105 : vector<8x8xf32>
    %107 = math.exp %106 : vector<8x8xf32>
    %cst_54 = arith.constant dense<0.000000e+00> : vector<8xf32>
    %108 = vector.multi_reduction <add>, %107, %cst_54 [1] : vector<8x8xf32> to vector<8xf32>
    %109 = vector.shape_cast %108 : vector<8xf32> to vector<8x1xf32>
    %110 = tpu.reciprocal %109 {approx = true} : vector<8x1xf32> -> vector<8x1xf32>
    %111 = vector.broadcast %110 : vector<8x1xf32> to vector<8x8xf32>
    %112 = arith.mulf %107, %111 : vector<8x8xf32>
    %cst_55 = arith.constant dense<0.000000e+00> : vector<8x4xf32>
    %113 = tpu.matmul %112, %99, %cst_55 {dimension_numbers = #tpu.dot_dimension_numbers<[1], [0], [0], [1], [0, 0, 1, 1], [], []>} : vector<8x8xf32>, vector<8x4xf32>, vector<8x4xf32> -> vector<8x4xf32>
    %c3_56 = arith.constant 3 : index
    %c0_57 = arith.constant 0 : index
    %c0_58 = arith.constant 0 : index
    %114 = vector.load %arg7[%c3_56, %c0_57, %c0_58] : memref<8x4x32xf32, #tpu.memory_space<vmem>>, vector<1x4x32xf32>
    %115 = vector.shape_cast %114 : vector<1x4x32xf32> to vector<4x32xf32>
    %cst_59 = arith.constant dense<0.000000e+00> : vector<8x32xf32>
    %116 = tpu.matmul %113, %115, %cst_59 {dimension_numbers = #tpu.dot_dimension_numbers<[1], [0], [0], [1], [0, 0, 1, 1], [], []>} : vector<8x4xf32>, vector<4x32xf32>, vector<8x32xf32> -> vector<8x32xf32>
    %117 = arith.addf %95, %116 : vector<8x32xf32>
    %c4 = arith.constant 4 : index
    %c0_60 = arith.constant 0 : index
    %c0_61 = arith.constant 0 : index
    %118 = vector.load %arg2[%c4, %c0_60, %c0_61] : memref<8x8x4xf32, #tpu.memory_space<vmem>>, vector<1x8x4xf32>
    %119 = vector.shape_cast %118 : vector<1x8x4xf32> to vector<8x4xf32>
    %120 = vector.extract_strided_slice %30 {offsets = [0, 16], sizes = [8, 4], strides = [1, 1]} : vector<8x64xf32> to vector<8x4xf32>
    %121 = vector.extract_strided_slice %30 {offsets = [0, 48], sizes = [8, 4], strides = [1, 1]} : vector<8x64xf32> to vector<8x4xf32>
    %cst_62 = arith.constant dense<0.000000e+00> : vector<8x8xf32>
    %122 = tpu.matmul %119, %120, %cst_62 {dimension_numbers = #tpu.dot_dimension_numbers<[1], [1], [0], [0], [0, 0, 1, 0], [], []>} : vector<8x4xf32>, vector<8x4xf32>, vector<8x8xf32> -> vector<8x8xf32>
    %cst_63 = arith.constant 5.000000e-01 : f32
    %123 = vector.broadcast %cst_63 : f32 to vector<8x8xf32>
    %124 = arith.mulf %122, %123 : vector<8x8xf32>
    %cst_64 = arith.constant dense<0xFF800000> : vector<8xf32>
    %125 = vector.multi_reduction <maximumf>, %124, %cst_64 [1] : vector<8x8xf32> to vector<8xf32>
    %126 = vector.shape_cast %125 : vector<8xf32> to vector<8x1xf32>
    %127 = vector.broadcast %126 : vector<8x1xf32> to vector<8x8xf32>
    %128 = arith.subf %124, %127 : vector<8x8xf32>
    %129 = math.exp %128 : vector<8x8xf32>
    %cst_65 = arith.constant dense<0.000000e+00> : vector<8xf32>
    %130 = vector.multi_reduction <add>, %129, %cst_65 [1] : vector<8x8xf32> to vector<8xf32>
    %131 = vector.shape_cast %130 : vector<8xf32> to vector<8x1xf32>
    %132 = tpu.reciprocal %131 {approx = true} : vector<8x1xf32> -> vector<8x1xf32>
    %133 = vector.broadcast %132 : vector<8x1xf32> to vector<8x8xf32>
    %134 = arith.mulf %129, %133 : vector<8x8xf32>
    %cst_66 = arith.constant dense<0.000000e+00> : vector<8x4xf32>
    %135 = tpu.matmul %134, %121, %cst_66 {dimension_numbers = #tpu.dot_dimension_numbers<[1], [0], [0], [1], [0, 0, 1, 1], [], []>} : vector<8x8xf32>, vector<8x4xf32>, vector<8x4xf32> -> vector<8x4xf32>
    %c4_67 = arith.constant 4 : index
    %c0_68 = arith.constant 0 : index
    %c0_69 = arith.constant 0 : index
    %136 = vector.load %arg7[%c4_67, %c0_68, %c0_69] : memref<8x4x32xf32, #tpu.memory_space<vmem>>, vector<1x4x32xf32>
    %137 = vector.shape_cast %136 : vector<1x4x32xf32> to vector<4x32xf32>
    %cst_70 = arith.constant dense<0.000000e+00> : vector<8x32xf32>
    %138 = tpu.matmul %135, %137, %cst_70 {dimension_numbers = #tpu.dot_dimension_numbers<[1], [0], [0], [1], [0, 0, 1, 1], [], []>} : vector<8x4xf32>, vector<4x32xf32>, vector<8x32xf32> -> vector<8x32xf32>
    %139 = arith.addf %117, %138 : vector<8x32xf32>
    %c5 = arith.constant 5 : index
    %c0_71 = arith.constant 0 : index
    %c0_72 = arith.constant 0 : index
    %140 = vector.load %arg2[%c5, %c0_71, %c0_72] : memref<8x8x4xf32, #tpu.memory_space<vmem>>, vector<1x8x4xf32>
    %141 = vector.shape_cast %140 : vector<1x8x4xf32> to vector<8x4xf32>
    %142 = vector.extract_strided_slice %30 {offsets = [0, 20], sizes = [8, 4], strides = [1, 1]} : vector<8x64xf32> to vector<8x4xf32>
    %143 = vector.extract_strided_slice %30 {offsets = [0, 52], sizes = [8, 4], strides = [1, 1]} : vector<8x64xf32> to vector<8x4xf32>
    %cst_73 = arith.constant dense<0.000000e+00> : vector<8x8xf32>
    %144 = tpu.matmul %141, %142, %cst_73 {dimension_numbers = #tpu.dot_dimension_numbers<[1], [1], [0], [0], [0, 0, 1, 0], [], []>} : vector<8x4xf32>, vector<8x4xf32>, vector<8x8xf32> -> vector<8x8xf32>
    %cst_74 = arith.constant 5.000000e-01 : f32
    %145 = vector.broadcast %cst_74 : f32 to vector<8x8xf32>
    %146 = arith.mulf %144, %145 : vector<8x8xf32>
    %cst_75 = arith.constant dense<0xFF800000> : vector<8xf32>
    %147 = vector.multi_reduction <maximumf>, %146, %cst_75 [1] : vector<8x8xf32> to vector<8xf32>
    %148 = vector.shape_cast %147 : vector<8xf32> to vector<8x1xf32>
    %149 = vector.broadcast %148 : vector<8x1xf32> to vector<8x8xf32>
    %150 = arith.subf %146, %149 : vector<8x8xf32>
    %151 = math.exp %150 : vector<8x8xf32>
    %cst_76 = arith.constant dense<0.000000e+00> : vector<8xf32>
    %152 = vector.multi_reduction <add>, %151, %cst_76 [1] : vector<8x8xf32> to vector<8xf32>
    %153 = vector.shape_cast %152 : vector<8xf32> to vector<8x1xf32>
    %154 = tpu.reciprocal %153 {approx = true} : vector<8x1xf32> -> vector<8x1xf32>
    %155 = vector.broadcast %154 : vector<8x1xf32> to vector<8x8xf32>
    %156 = arith.mulf %151, %155 : vector<8x8xf32>
    %cst_77 = arith.constant dense<0.000000e+00> : vector<8x4xf32>
    %157 = tpu.matmul %156, %143, %cst_77 {dimension_numbers = #tpu.dot_dimension_numbers<[1], [0], [0], [1], [0, 0, 1, 1], [], []>} : vector<8x8xf32>, vector<8x4xf32>, vector<8x4xf32> -> vector<8x4xf32>
    %c5_78 = arith.constant 5 : index
    %c0_79 = arith.constant 0 : index
    %c0_80 = arith.constant 0 : index
    %158 = vector.load %arg7[%c5_78, %c0_79, %c0_80] : memref<8x4x32xf32, #tpu.memory_space<vmem>>, vector<1x4x32xf32>
    %159 = vector.shape_cast %158 : vector<1x4x32xf32> to vector<4x32xf32>
    %cst_81 = arith.constant dense<0.000000e+00> : vector<8x32xf32>
    %160 = tpu.matmul %157, %159, %cst_81 {dimension_numbers = #tpu.dot_dimension_numbers<[1], [0], [0], [1], [0, 0, 1, 1], [], []>} : vector<8x4xf32>, vector<4x32xf32>, vector<8x32xf32> -> vector<8x32xf32>
    %161 = arith.addf %139, %160 : vector<8x32xf32>
    %c6 = arith.constant 6 : index
    %c0_82 = arith.constant 0 : index
    %c0_83 = arith.constant 0 : index
    %162 = vector.load %arg2[%c6, %c0_82, %c0_83] : memref<8x8x4xf32, #tpu.memory_space<vmem>>, vector<1x8x4xf32>
    %163 = vector.shape_cast %162 : vector<1x8x4xf32> to vector<8x4xf32>
    %164 = vector.extract_strided_slice %30 {offsets = [0, 24], sizes = [8, 4], strides = [1, 1]} : vector<8x64xf32> to vector<8x4xf32>
    %165 = vector.extract_strided_slice %30 {offsets = [0, 56], sizes = [8, 4], strides = [1, 1]} : vector<8x64xf32> to vector<8x4xf32>
    %cst_84 = arith.constant dense<0.000000e+00> : vector<8x8xf32>
    %166 = tpu.matmul %163, %164, %cst_84 {dimension_numbers = #tpu.dot_dimension_numbers<[1], [1], [0], [0], [0, 0, 1, 0], [], []>} : vector<8x4xf32>, vector<8x4xf32>, vector<8x8xf32> -> vector<8x8xf32>
    %cst_85 = arith.constant 5.000000e-01 : f32
    %167 = vector.broadcast %cst_85 : f32 to vector<8x8xf32>
    %168 = arith.mulf %166, %167 : vector<8x8xf32>
    %cst_86 = arith.constant dense<0xFF800000> : vector<8xf32>
    %169 = vector.multi_reduction <maximumf>, %168, %cst_86 [1] : vector<8x8xf32> to vector<8xf32>
    %170 = vector.shape_cast %169 : vector<8xf32> to vector<8x1xf32>
    %171 = vector.broadcast %170 : vector<8x1xf32> to vector<8x8xf32>
    %172 = arith.subf %168, %171 : vector<8x8xf32>
    %173 = math.exp %172 : vector<8x8xf32>
    %cst_87 = arith.constant dense<0.000000e+00> : vector<8xf32>
    %174 = vector.multi_reduction <add>, %173, %cst_87 [1] : vector<8x8xf32> to vector<8xf32>
    %175 = vector.shape_cast %174 : vector<8xf32> to vector<8x1xf32>
    %176 = tpu.reciprocal %175 {approx = true} : vector<8x1xf32> -> vector<8x1xf32>
    %177 = vector.broadcast %176 : vector<8x1xf32> to vector<8x8xf32>
    %178 = arith.mulf %173, %177 : vector<8x8xf32>
    %cst_88 = arith.constant dense<0.000000e+00> : vector<8x4xf32>
    %179 = tpu.matmul %178, %165, %cst_88 {dimension_numbers = #tpu.dot_dimension_numbers<[1], [0], [0], [1], [0, 0, 1, 1], [], []>} : vector<8x8xf32>, vector<8x4xf32>, vector<8x4xf32> -> vector<8x4xf32>
    %c6_89 = arith.constant 6 : index
    %c0_90 = arith.constant 0 : index
    %c0_91 = arith.constant 0 : index
    %180 = vector.load %arg7[%c6_89, %c0_90, %c0_91] : memref<8x4x32xf32, #tpu.memory_space<vmem>>, vector<1x4x32xf32>
    %181 = vector.shape_cast %180 : vector<1x4x32xf32> to vector<4x32xf32>
    %cst_92 = arith.constant dense<0.000000e+00> : vector<8x32xf32>
    %182 = tpu.matmul %179, %181, %cst_92 {dimension_numbers = #tpu.dot_dimension_numbers<[1], [0], [0], [1], [0, 0, 1, 1], [], []>} : vector<8x4xf32>, vector<4x32xf32>, vector<8x32xf32> -> vector<8x32xf32>
    %183 = arith.addf %161, %182 : vector<8x32xf32>
    %c7 = arith.constant 7 : index
    %c0_93 = arith.constant 0 : index
    %c0_94 = arith.constant 0 : index
    %184 = vector.load %arg2[%c7, %c0_93, %c0_94] : memref<8x8x4xf32, #tpu.memory_space<vmem>>, vector<1x8x4xf32>
    %185 = vector.shape_cast %184 : vector<1x8x4xf32> to vector<8x4xf32>
    %186 = vector.extract_strided_slice %30 {offsets = [0, 28], sizes = [8, 4], strides = [1, 1]} : vector<8x64xf32> to vector<8x4xf32>
    %187 = vector.extract_strided_slice %30 {offsets = [0, 60], sizes = [8, 4], strides = [1, 1]} : vector<8x64xf32> to vector<8x4xf32>
    %cst_95 = arith.constant dense<0.000000e+00> : vector<8x8xf32>
    %188 = tpu.matmul %185, %186, %cst_95 {dimension_numbers = #tpu.dot_dimension_numbers<[1], [1], [0], [0], [0, 0, 1, 0], [], []>} : vector<8x4xf32>, vector<8x4xf32>, vector<8x8xf32> -> vector<8x8xf32>
    %cst_96 = arith.constant 5.000000e-01 : f32
    %189 = vector.broadcast %cst_96 : f32 to vector<8x8xf32>
    %190 = arith.mulf %188, %189 : vector<8x8xf32>
    %cst_97 = arith.constant dense<0xFF800000> : vector<8xf32>
    %191 = vector.multi_reduction <maximumf>, %190, %cst_97 [1] : vector<8x8xf32> to vector<8xf32>
    %192 = vector.shape_cast %191 : vector<8xf32> to vector<8x1xf32>
    %193 = vector.broadcast %192 : vector<8x1xf32> to vector<8x8xf32>
    %194 = arith.subf %190, %193 : vector<8x8xf32>
    %195 = math.exp %194 : vector<8x8xf32>
    %cst_98 = arith.constant dense<0.000000e+00> : vector<8xf32>
    %196 = vector.multi_reduction <add>, %195, %cst_98 [1] : vector<8x8xf32> to vector<8xf32>
    %197 = vector.shape_cast %196 : vector<8xf32> to vector<8x1xf32>
    %198 = tpu.reciprocal %197 {approx = true} : vector<8x1xf32> -> vector<8x1xf32>
    %199 = vector.broadcast %198 : vector<8x1xf32> to vector<8x8xf32>
    %200 = arith.mulf %195, %199 : vector<8x8xf32>
    %cst_99 = arith.constant dense<0.000000e+00> : vector<8x4xf32>
    %201 = tpu.matmul %200, %187, %cst_99 {dimension_numbers = #tpu.dot_dimension_numbers<[1], [0], [0], [1], [0, 0, 1, 1], [], []>} : vector<8x8xf32>, vector<8x4xf32>, vector<8x4xf32> -> vector<8x4xf32>
    %c7_100 = arith.constant 7 : index
    %c0_101 = arith.constant 0 : index
    %c0_102 = arith.constant 0 : index
    %202 = vector.load %arg7[%c7_100, %c0_101, %c0_102] : memref<8x4x32xf32, #tpu.memory_space<vmem>>, vector<1x4x32xf32>
    %203 = vector.shape_cast %202 : vector<1x4x32xf32> to vector<4x32xf32>
    %cst_103 = arith.constant dense<0.000000e+00> : vector<8x32xf32>
    %204 = tpu.matmul %201, %203, %cst_103 {dimension_numbers = #tpu.dot_dimension_numbers<[1], [0], [0], [1], [0, 0, 1, 1], [], []>} : vector<8x4xf32>, vector<4x32xf32>, vector<8x32xf32> -> vector<8x32xf32>
    %205 = arith.addf %183, %204 : vector<8x32xf32>
    %c0_104 = arith.constant 0 : index
    %c0_105 = arith.constant 0 : index
    %206 = vector.load %arg8[%c0_104, %c0_105] : memref<1x32xf32, #tpu.memory_space<vmem>>, vector<1x32xf32>
    %207 = vector.broadcast %206 : vector<1x32xf32> to vector<8x32xf32>
    %208 = arith.addf %205, %207 : vector<8x32xf32>
    %c0_106 = arith.constant 0 : index
    %c0_107 = arith.constant 0 : index
    %c0_108 = arith.constant 0 : index
    %209 = vector.load %arg9[%c0_106, %c0_107, %c0_108] : memref<1x8x32xf32, #tpu.memory_space<vmem>>, vector<1x8x32xf32>
    %210 = vector.shape_cast %209 : vector<1x8x32xf32> to vector<8x32xf32>
    %211 = vector.shape_cast %208 : vector<8x32xf32> to vector<1x8x32xf32>
    tpu.vector_store %arg9[%c0_106, %c0_107, %c0_108], %211 {strides = array<i32>} : memref<1x8x32xf32, #tpu.memory_space<vmem>>, vector<1x8x32xf32>,
    return
  }
  func.func @transform_0(%arg0: i32) -> (i32, i32, i32) {
    %c0_i32 = arith.constant 0 : i32
    %c0_i32_0 = arith.constant 0 : i32
    %c0_i32_1 = arith.constant 0 : i32
    return %arg0, %c0_i32, %c0_i32_0 : i32, i32, i32
  }
  func.func @transform_1(%arg0: i32) -> (i32, i32, i32) {
    %c0_i32 = arith.constant 0 : i32
    %c0_i32_0 = arith.constant 0 : i32
    %c0_i32_1 = arith.constant 0 : i32
    %c0_i32_2 = arith.constant 0 : i32
    return %c0_i32, %c0_i32_0, %c0_i32_1 : i32, i32, i32
  }
  func.func @transform_2(%arg0: i32) -> (i32, i32) {
    %c0_i32 = arith.constant 0 : i32
    %c0_i32_0 = arith.constant 0 : i32
    %c0_i32_1 = arith.constant 0 : i32
    return %c0_i32, %c0_i32_0 : i32, i32
  }
  func.func @transform_3(%arg0: i32) -> (i32, i32) {
    %c0_i32 = arith.constant 0 : i32
    %c0_i32_0 = arith.constant 0 : i32
    %c0_i32_1 = arith.constant 0 : i32
    return %c0_i32, %c0_i32_0 : i32, i32
  }
  func.func @transform_4(%arg0: i32) -> (i32, i32) {
    %c0_i32 = arith.constant 0 : i32
    %c0_i32_0 = arith.constant 0 : i32
    %c0_i32_1 = arith.constant 0 : i32
    return %c0_i32, %c0_i32_0 : i32, i32
  }
  func.func @transform_5(%arg0: i32) -> (i32, i32) {
    %c0_i32 = arith.constant 0 : i32
    %c0_i32_0 = arith.constant 0 : i32
    %c0_i32_1 = arith.constant 0 : i32
    return %c0_i32, %c0_i32_0 : i32, i32
  }
  func.func @transform_6(%arg0: i32) -> (i32, i32, i32) {
    %c0_i32 = arith.constant 0 : i32
    %c0_i32_0 = arith.constant 0 : i32
    %c0_i32_1 = arith.constant 0 : i32
    %c0_i32_2 = arith.constant 0 : i32
    return %c0_i32, %c0_i32_0, %c0_i32_1 : i32, i32, i32
  }
  func.func @transform_7(%arg0: i32) -> (i32, i32) {
    %c0_i32 = arith.constant 0 : i32
    %c0_i32_0 = arith.constant 0 : i32
    %c0_i32_1 = arith.constant 0 : i32
    return %c0_i32, %c0_i32_0 : i32, i32
  }
  func.func @transform_8(%arg0: i32) -> (i32, i32, i32) {
    %c0_i32 = arith.constant 0 : i32
    %c0_i32_0 = arith.constant 0 : i32
    %c0_i32_1 = arith.constant 0 : i32
    return %arg0, %c0_i32, %c0_i32_0 : i32, i32, i32
  }
}

</mosaic_0001>

<llo_original>
// kernel: cross_attention_gather.1
$region0: #{cross_attention_gather.1}
  #allocation0 [shape = 'u32[]', space=smem, size = 0x4, offset = 0x4, fixed_abs, tag = 'smem constant byte address 0x4 - core index']
  #allocation1 [shape = 'u32[144,128]{1,0:T(1,128)}', space=vmem, size = 0x12000, scoped, tag = 'internal scratch']
  %s0 = inlined_call_operand.vmem [shape: f32[2,8,32], index: 0, kind: input, shape index: {}]
  %s1 = inlined_call_operand.vmem [shape: f32[8,8,4], index: 1, kind: input, shape index: {}]
  %s2 = inlined_call_operand.vmem [shape: f32[1,32], index: 2, kind: input, shape index: {}]
  %s3 = inlined_call_operand.vmem [shape: f32[1,32], index: 3, kind: input, shape index: {}]
  %s4 = inlined_call_operand.vmem [shape: f32[32,64], index: 4, kind: input, shape index: {}]
  %s5 = inlined_call_operand.vmem [shape: f32[1,64], index: 5, kind: input, shape index: {}]
  %s6 = inlined_call_operand.vmem [shape: f32[8,4,32], index: 6, kind: input, shape index: {}]
  %s7 = inlined_call_operand.vmem [shape: f32[1,32], index: 7, kind: input, shape index: {}]
  %s8 = inlined_call_operand.hbm [shape: f32[2,8,32], index: 8, kind: output, shape index: {}]
  %s9 = sld [smem:[#allocation0]]
  $region65: #{cross_attention_gather.1} parent=0
    _
  %s11 = ssub.s32 1, %s9
  %s12 = scalar_select 0, %s11, %s9
  $region1: #{cross_attention_gather.1} parent=0
    #allocation2 [shape = 'u8[8192]{0}', space=vmem, size = 0x2000, scoped, tag = 'output window, operand 0']
    #allocation3 [shape = 's32[2]{0}', space=sflag, size = 0x8, scoped, tag = 'scoped memory for cross_attention_gather.1']
    %13 = vsyncpa [#allocation3], 0
    %s14 = scalar_lea.sflag [#allocation3], 1
    %15 = vsyncpa %s14, 0
    loop: start=0, step=1, limit=4
    $region2: #{cross_attention_gather.1} parent=1 // loop_pre_header
      _
    $region3: #{cross_attention_gather.1} parent=1 // loop_header
      %s17 = sphi 0, %s21
      %p18 = scmp.ge.s32.totalorder %s17, 4
      %s27 = sphi 0, %s29
      %s30 = sphi 0, %s27
      %s31 = sphi 0, %s30
      %s47 = sphi 0, %s31
      %s51 = sphi 0, %s51
      %s53 = sphi 0, %s51
      %s54 = sphi 0, %s53
      %s68 = sphi 0, %s54
      %s72 = sphi 0, %s72
      %s74 = sphi 0, %s72
      %s75 = sphi 0, %s74
      %s89 = sphi 0, %s75
      %s93 = sphi 0, %s93
      %s95 = sphi 0, %s93
      %s96 = sphi 0, %s95
      %s110 = sphi 0, %s96
      %s114 = sphi 0, %s114
      %s116 = sphi 0, %s114
      %s117 = sphi 0, %s116
      %s131 = sphi 0, %s117
      %s135 = sphi 0, %s135
      %s137 = sphi 0, %s135
      %s138 = sphi 0, %s137
      %s152 = sphi 0, %s138
      %s156 = sphi 0, %s156
      %s158 = sphi 0, %s156
      %s159 = sphi 0, %s158
      %s173 = sphi 0, %s159
      %s177 = sphi 0, %s177
      %s179 = sphi 0, %s177
      %s180 = sphi 0, %s179
      %s194 = sphi 0, %s180
      %s200 = sphi 0, %s202
      %s203 = sphi 0, %s200
      %s204 = sphi 0, %s203
      %s220 = sphi 0, %s204
    $region4: #{cross_attention_gather.1} parent=1 // loop_header_branch
      %20 = sbr.rel (%p18) target = $region8
    $region5: #{cross_attention_gather.1} parent=1 // loop_body
      %s22 = ssub.s32 %s17, 1
      %s23 = ssub.s32 %s17, 2
      %s24 = sadd.s32 %s17, 1
      %s25 = ssub.s32 %s17, %s24
      %p26 = scmp.eq.s32.totalorder %s25, 0
      %s28 = sadd.s32 %s27, 1
      %s29 = scalar_select %p26, %s27, %s28
      %p32 = pneg %p26
      %p33 = scmp.eq.s32.totalorder %s17, 1
      %p34 = por %p32, %p33
      %p35 = scmp.ne.s32.totalorder %s27, %s30
      %p36 = scmp.eq.s32.totalorder %s17, 0
      %p37 = por %p35, %p36
      %p38 = scmp.ne.s32.totalorder %s27, %s30
      %p39 = scmp.eq.s32.totalorder %s22, 1
      %p40 = por %p38, %p39
      %p41 = scmp.ne.s32.totalorder %s30, %s31
      %p42 = scmp.eq.s32.totalorder %s22, 0
      %p43 = por %p41, %p42
      %p44 = scmp.ne.s32.totalorder %s30, %s31
      %p45 = scmp.eq.s32.totalorder %s23, 1
      %p46 = por %p44, %p45
      %p48 = scmp.ne.s32.totalorder %s31, %s47
      %p49 = scmp.eq.s32.totalorder %s23, 0
      %p50 = por %p48, %p49
      %s52 = sadd.s32 %s51, 1
      %p55 = scmp.eq.s32.totalorder %s17, 1
      %p56 = scmp.ne.s32.totalorder %s51, %s53
      %p57 = scmp.eq.s32.totalorder %s17, 0
      %p58 = por %p56, %p57
      %p59 = scmp.ne.s32.totalorder %s51, %s53
      %p60 = scmp.eq.s32.totalorder %s22, 1
      %p61 = por %p59, %p60
      %p62 = scmp.ne.s32.totalorder %s53, %s54
      %p63 = scmp.eq.s32.totalorder %s22, 0
      %p64 = por %p62, %p63
      %p65 = scmp.ne.s32.totalorder %s53, %s54
      %p66 = scmp.eq.s32.totalorder %s23, 1
      %p67 = por %p65, %p66
      %p69 = scmp.ne.s32.totalorder %s54, %s68
      %p70 = scmp.eq.s32.totalorder %s23, 0
      %p71 = por %p69, %p70
      %s73 = sadd.s32 %s72, 1
      %p76 = scmp.eq.s32.totalorder %s17, 1
      %p77 = scmp.ne.s32.totalorder %s72, %s74
      %p78 = scmp.eq.s32.totalorder %s17, 0
      %p79 = por %p77, %p78
      %p80 = scmp.ne.s32.totalorder %s72, %s74
      %p81 = scmp.eq.s32.totalorder %s22, 1
      %p82 = por %p80, %p81
      %p83 = scmp.ne.s32.totalorder %s74, %s75
      %p84 = scmp.eq.s32.totalorder %s22, 0
      %p85 = por %p83, %p84
      %p86 = scmp.ne.s32.totalorder %s74, %s75
      %p87 = scmp.eq.s32.totalorder %s23, 1
      %p88 = por %p86, %p87
      %p90 = scmp.ne.s32.totalorder %s75, %s89
      %p91 = scmp.eq.s32.totalorder %s23, 0
      %p92 = por %p90, %p91
      %s94 = sadd.s32 %s93, 1
      %p97 = scmp.eq.s32.totalorder %s17, 1
      %p98 = scmp.ne.s32.totalorder %s93, %s95
      %p99 = scmp.eq.s32.totalorder %s17, 0
      %p100 = por %p98, %p99
      %p101 = scmp.ne.s32.totalorder %s93, %s95
      %p102 = scmp.eq.s32.totalorder %s22, 1
      %p103 = por %p101, %p102
      %p104 = scmp.ne.s32.totalorder %s95, %s96
      %p105 = scmp.eq.s32.totalorder %s22, 0
      %p106 = por %p104, %p105
      %p107 = scmp.ne.s32.totalorder %s95, %s96
      %p108 = scmp.eq.s32.totalorder %s23, 1
      %p109 = por %p107, %p108
      %p111 = scmp.ne.s32.totalorder %s96, %s110
      %p112 = scmp.eq.s32.totalorder %s23, 0
      %p113 = por %p111, %p112
      %s115 = sadd.s32 %s114, 1
      %p118 = scmp.eq.s32.totalorder %s17, 1
      %p119 = scmp.ne.s32.totalorder %s114, %s116
      %p120 = scmp.eq.s32.totalorder %s17, 0
      %p121 = por %p119, %p120
      %p122 = scmp.ne.s32.totalorder %s114, %s116
      %p123 = scmp.eq.s32.totalorder %s22, 1
      %p124 = por %p122, %p123
      %p125 = scmp.ne.s32.totalorder %s116, %s117
      %p126 = scmp.eq.s32.totalorder %s22, 0
      %p127 = por %p125, %p126
      %p128 = scmp.ne.s32.totalorder %s116, %s117
      %p129 = scmp.eq.s32.totalorder %s23, 1
      %p130 = por %p128, %p129
      %p132 = scmp.ne.s32.totalorder %s117, %s131
      %p133 = scmp.eq.s32.totalorder %s23, 0
      %p134 = por %p132, %p133
      %s136 = sadd.s32 %s135, 1
      %p139 = scmp.eq.s32.totalorder %s17, 1
      %p140 = scmp.ne.s32.totalorder %s135, %s137
      %p141 = scmp.eq.s32.totalorder %s17, 0
      %p142 = por %p140, %p141
      %p143 = scmp.ne.s32.totalorder %s135, %s137
      %p144 = scmp.eq.s32.totalorder %s22, 1
      %p145 = por %p143, %p144
      %p146 = scmp.ne.s32.totalorder %s137, %s138
      %p147 = scmp.eq.s32.totalorder %s22, 0
      %p148 = por %p146, %p147
      %p149 = scmp.ne.s32.totalorder %s137, %s138
      %p150 = scmp.eq.s32.totalorder %s23, 1
      %p151 = por %p149, %p150
      %p153 = scmp.ne.s32.totalorder %s138, %s152
      %p154 = scmp.eq.s32.totalorder %s23, 0
      %p155 = por %p153, %p154
      %s157 = sadd.s32 %s156, 1
      %p160 = scmp.eq.s32.totalorder %s17, 1
      %p161 = scmp.ne.s32.totalorder %s156, %s158
      %p162 = scmp.eq.s32.totalorder %s17, 0
      %p163 = por %p161, %p162
      %p164 = scmp.ne.s32.totalorder %s156, %s158
      %p165 = scmp.eq.s32.totalorder %s22, 1
      %p166 = por %p164, %p165
      %p167 = scmp.ne.s32.totalorder %s158, %s159
      %p168 = scmp.eq.s32.totalorder %s22, 0
      %p169 = por %p167, %p168
      %p170 = scmp.ne.s32.totalorder %s158, %s159
      %p171 = scmp.eq.s32.totalorder %s23, 1
      %p172 = por %p170, %p171
      %p174 = scmp.ne.s32.totalorder %s159, %s173
      %p175 = scmp.eq.s32.totalorder %s23, 0
      %p176 = por %p174, %p175
      %s178 = sadd.s32 %s177, 1
      %p181 = scmp.eq.s32.totalorder %s17, 1
      %p182 = scmp.ne.s32.totalorder %s177, %s179
      %p183 = scmp.eq.s32.totalorder %s17, 0
      %p184 = por %p182, %p183
      %p185 = scmp.ne.s32.totalorder %s177, %s179
      %p186 = scmp.eq.s32.totalorder %s22, 1
      %p187 = por %p185, %p186
      %p188 = scmp.ne.s32.totalorder %s179, %s180
      %p189 = scmp.eq.s32.totalorder %s22, 0
      %p190 = por %p188, %p189
      %p191 = scmp.ne.s32.totalorder %s179, %s180
      %p192 = scmp.eq.s32.totalorder %s23, 1
      %p193 = por %p191, %p192
      %p195 = scmp.ne.s32.totalorder %s180, %s194
      %p196 = scmp.eq.s32.totalorder %s23, 0
      %p197 = por %p195, %p196
      %s198 = ssub.s32 %s17, %s24
      %p199 = scmp.eq.s32.totalorder %s198, 0
      %s201 = sadd.s32 %s200, 1
      %s202 = scalar_select %p199, %s200, %s201
      %p205 = pneg %p199
      %p206 = scmp.eq.s32.totalorder %s17, 1
      %p207 = por %p205, %p206
      %p208 = scmp.ne.s32.totalorder %s200, %s203
      %p209 = scmp.eq.s32.totalorder %s17, 0
      %p210 = por %p208, %p209
      %p211 = scmp.ne.s32.totalorder %s200, %s203
      %p212 = scmp.eq.s32.totalorder %s22, 1
      %p213 = por %p211, %p212
      %p214 = scmp.ne.s32.totalorder %s203, %s204
      %p215 = scmp.eq.s32.totalorder %s22, 0
      %p216 = por %p214, %p215
      %p217 = scmp.ne.s32.totalorder %s203, %s204
      %p218 = scmp.eq.s32.totalorder %s23, 1
      %p219 = por %p217, %p218
      %p221 = scmp.ne.s32.totalorder %s204, %s220
      %p222 = scmp.eq.s32.totalorder %s23, 0
      %p223 = por %p221, %p222
      %p224 = scmp.le.s32.totalorder 1, %s17
      %p225 = scmp.lt.s32.totalorder %s17, 3
      %p226 = pnand %p224, %p225
      %p227 = pneg %p226
      // Predicated region
      $region9: #{cross_attention_gather.1} parent=5 // pred_check
        _
      $region10: #{cross_attention_gather.1} parent=5 // pred_check_branch
        %229 = sbr.rel (%p226) target = $region12
      $region11: #{cross_attention_gather.1} parent=5 // pred_region
        %s230 = ssub.s32 %s17, 1
        // Predicated region
        $region13: #{cross_attention_gather.1} parent=11 // pred_check
          %p231 = pneg %p64
        $region14: #{cross_attention_gather.1} parent=11 // pred_check_branch
          %233 = sbr.rel (%p231) target = $region16
        $region15: #{cross_attention_gather.1} parent=11 // pred_region
          _
        $region16: #{cross_attention_gather.1} parent=11 // pred_fallthru
          _
        // Predicated region
        $region17: #{cross_attention_gather.1} parent=11 // pred_check
          %p234 = pneg %p85
        $region18: #{cross_attention_gather.1} parent=11 // pred_check_branch
          %236 = sbr.rel (%p234) target = $region20
        $region19: #{cross_attention_gather.1} parent=11 // pred_region
          _
        $region20: #{cross_attention_gather.1} parent=11 // pred_fallthru
          _
        // Predicated region
        $region21: #{cross_attention_gather.1} parent=11 // pred_check
          %p237 = pneg %p106
        $region22: #{cross_attention_gather.1} parent=11 // pred_check_branch
          %239 = sbr.rel (%p237) target = $region24
        $region23: #{cross_attention_gather.1} parent=11 // pred_region
          _
        $region24: #{cross_attention_gather.1} parent=11 // pred_fallthru
          _
        // Predicated region
        $region25: #{cross_attention_gather.1} parent=11 // pred_check
          %p240 = pneg %p127
        $region26: #{cross_attention_gather.1} parent=11 // pred_check_branch
          %242 = sbr.rel (%p240) target = $region28
        $region27: #{cross_attention_gather.1} parent=11 // pred_region
          _
        $region28: #{cross_attention_gather.1} parent=11 // pred_fallthru
          _
        // Predicated region
        $region29: #{cross_attention_gather.1} parent=11 // pred_check
          %p243 = pneg %p148
        $region30: #{cross_attention_gather.1} parent=11 // pred_check_branch
          %245 = sbr.rel (%p243) target = $region32
        $region31: #{cross_attention_gather.1} parent=11 // pred_region
          _
        $region32: #{cross_attention_gather.1} parent=11 // pred_fallthru
          _
        // Predicated region
        $region33: #{cross_attention_gather.1} parent=11 // pred_check
          %p246 = pneg %p169
        $region34: #{cross_attention_gather.1} parent=11 // pred_check_branch
          %248 = sbr.rel (%p246) target = $region36
        $region35: #{cross_attention_gather.1} parent=11 // pred_region
          _
        $region36: #{cross_attention_gather.1} parent=11 // pred_fallthru
          _
        // Predicated region
        $region37: #{cross_attention_gather.1} parent=11 // pred_check
          %p249 = pneg %p190
        $region38: #{cross_attention_gather.1} parent=11 // pred_check_branch
          %251 = sbr.rel (%p249) target = $region40
        $region39: #{cross_attention_gather.1} parent=11 // pred_region
          _
        $region40: #{cross_attention_gather.1} parent=11 // pred_fallthru
          _
      $region12: #{cross_attention_gather.1} parent=5 // pred_fallthru
        _
      %p252 = scmp.lt.s32.totalorder %s17, 2
      // Predicated region
      $region41: #{cross_attention_gather.1} parent=5 // pred_check
        %p253 = pneg %p252
      $region42: #{cross_attention_gather.1} parent=5 // pred_check_branch
        %255 = sbr.rel (%p253) target = $region44
      $region43: #{cross_attention_gather.1} parent=5 // pred_region
        // Predicated region
        $region45: #{cross_attention_gather.1} parent=43 // pred_check
          %p256 = pneg %p37
        $region46: #{cross_attention_gather.1} parent=43 // pred_check_branch
          %258 = sbr.rel (%p256) target = $region48
        $region47: #{cross_attention_gather.1} parent=43 // pred_region
          %p259 = scmp.lt.s32.totalorder %s17, 1
          %s260 = scalar_select %p259, %s17, 1
          %s261 = smul.addr %s260, 8
          %s262 = scalar_lea.vmem %s0, %s261
        $region48: #{cross_attention_gather.1} parent=43 // pred_fallthru
          _
      $region44: #{cross_attention_gather.1} parent=5 // pred_fallthru
        _
      %p263 = scmp.le.s32.totalorder 1, %s17
      %p264 = scmp.lt.s32.totalorder %s17, 3
      %p265 = pnand %p263, %p264
      %p266 = pneg %p265
      // Predicated region
      $region49: #{cross_attention_gather.1} parent=5 // pred_check
        _
      $region50: #{cross_attention_gather.1} parent=5 // pred_check_branch
        %268 = sbr.rel (%p265) target = $region52
      $region51: #{cross_attention_gather.1} parent=5 // pred_region
        %s269 = ssub.s32 %s17, 1
        %p270 = scmp.lt.s32.totalorder %s22, 1
        %s271 = scalar_select %p270, %s22, 1
        %s272 = smul.addr %s271, 8
        %s273 = scalar_lea.vmem %s0, %s272
        %p274 = pneg %p43
        %p275 = pneg %p40
        %p276 = pneg %p64
        %p277 = pneg %p61
        %p278 = pneg %p85
        %p279 = pneg %p82
        %p280 = pneg %p106
        %p281 = pneg %p103
        %p282 = pneg %p127
        %p283 = pneg %p124
        %p284 = pneg %p148
        %p285 = pneg %p145
        %p286 = pneg %p169
        %p287 = pneg %p166
        %p288 = pneg %p190
        %p289 = pneg %p187
        %p290 = pneg %p216
        %p291 = pneg %p213
        %s292 = sand.u32 %s203, 1
        %s293 = scalar_lea.sflag [#allocation3], %s292
        %s294 = sand.u32 %s203, 1
        %s295 = smul.addr %s294, 8
        %s296 = scalar_lea.vmem [#allocation2], %s295
        %p297 = scmp.lt.s32.totalorder %s22, 1
        %s298 = scalar_select %p297, %s22, 1
        %s299 = smul.addr %s298, 8
        %s300 = scalar_lea.vmem %s0, %s299
        %v301 = vld [vmem:[%s300] sm:$0xff]
        %vm302 = vcmask 261120
        %v303 = vsel %vm302, %v301, 0.0
        %304 = vadd.xlane.f32.xlu0 %v303
        %v305 = vpop.xlane.xlu0 %304
        %v306 = vrcp.pop 32.0
        %v307 = vmul.f32 %v305, %v306
        %v308 = vsub.f32 %v301, %v307
        %v309 = vmul.f32 %v308, %v308
        %v310 = vsel %vm302, %v309, 0.0
        %311 = vadd.xlane.f32.xlu0 %v310
        %v312 = vpop.xlane.xlu0 %311
        %v313 = vmul.f32 %v312, %v306
        %v314 = vadd.f32 %v313, 1e-05
        %v315 = vrsqrt.pop %v314
        %v316 = vmul.f32 %v308, %v315
        %v317 = vld [vmem:[%s2] sm:$0x1]
        %v319 = vlaneseq
        %v320 = vshrl.u32 %v319, 7
        %v321 = vsub.s32 0, %v320
        %v322 = vrot.slane %v317, %v321
        %v324 = vmul.f32 %v316, %v322
        %v325 = vld [vmem:[%s3] sm:$0x1]
        %v327 = vlaneseq
        %v328 = vshrl.u32 %v327, 7
        %v329 = vsub.s32 0, %v328
        %v330 = vrot.slane %v325, %v329
        %v332 = vadd.f32 %v324, %v330
        %v333 = vld [vmem:[%s4] sm:$0xff]
        %v334 = vld [vmem:[%s4 + $0x8] sm:$0xff]
        %v335 = vld [vmem:[%s4 + $0x10] sm:$0xff]
        %v336 = vld [vmem:[%s4 + $0x18] sm:$0xff]
        %v337 = vld [vmem:[%s5] sm:$0x1]
        %v339 = vlaneseq
        %v340 = vshrl.u32 %v339, 7
        %v341 = vsub.s32 0, %v340
        %v342 = vrot.slane %v337, %v341
        %v345 = vsel %vm302, %v332, 0
        %347 = vmatprep.subr.mxu0 0.0
        %348 = vmatpush1.msra.mxu0 %v333
        %349 = vmatprep.subr.mxu0 0.0
        %350 = vmatpush1.msra.mxu0 %v334
        %351 = vmatprep.subr.mxu0 0.0
        %352 = vmatpush1.msra.mxu0 %v335
        %353 = vmatprep.subr.mxu0 0.0
        %354 = vmatpush1.msra.mxu0 %v336
        %355 = vmatprep.subr.mxu0 0.0
        %356 = vmatpush1.msra.mxu0 0.0
        %357 = vmatprep.subr.mxu0 0.0
        %358 = vmatpush1.msra.mxu0 0.0
        %359 = vmatprep.subr.mxu0 0.0
        %360 = vmatpush1.msra.mxu0 0.0
        %361 = vmatprep.subr.mxu0 0.0
        %362 = vmatpush1.msra.mxu0 0.0
        %363 = vmatprep.subr.mxu0 0.0
        %364 = vmatpush1.msra.mxu0 0.0
        %365 = vmatprep.subr.mxu0 0.0
        %366 = vmatpush1.msra.mxu0 0.0
        %367 = vmatprep.subr.mxu0 0.0
        %368 = vmatpush1.msra.mxu0 0.0
        %369 = vmatprep.subr.mxu0 0.0
        %370 = vmatpush1.msra.mxu0 0.0
        %371 = vmatprep.subr.mxu0 0.0
        %372 = vmatpush1.msra.mxu0 0.0
        %373 = vmatprep.subr.mxu0 0.0
        %374 = vmatpush1.msra.mxu0 0.0
        %375 = vmatprep.subr.mxu0 0.0
        %376 = vmatpush1.msra.mxu0 0.0
        %377 = vmatprep.subr.mxu0 0.0
        %378 = vmatpush1.msra.mxu0 0.0
        %379 = vmatprep.subr.mxu0 0.0
        %380 = vmatpush1.msra.mxu0 0.0
        %381 = vmatprep.subr.mxu0 0.0
        %382 = vmatpush1.msra.mxu0 0.0
        %383 = vmatprep.subr.mxu0 0.0
        %384 = vmatpush1.msra.mxu0 0.0
        %385 = vmatprep.subr.mxu0 0.0
        %386 = vmatpush1.msra.mxu0 0.0
        %387 = vmatprep.subr.mxu0 0.0
        %388 = vmatpush1.msra.mxu0 0.0
        %389 = vmatprep.subr.mxu0 0.0
        %390 = vmatpush1.msra.mxu0 0.0
        %391 = vmatprep.subr.mxu0 0.0
        %392 = vmatpush1.msra.mxu0 0.0
        %393 = vmatprep.subr.mxu0 0.0
        %394 = vmatpush1.msra.mxu0 0.0
        %395 = vmatprep.subr.mxu0 0.0
        %396 = vmatpush1.msra.mxu0 0.0
        %397 = vmatprep.subr.mxu0 0.0
        %398 = vmatpush1.msra.mxu0 0.0
        %399 = vmatprep.subr.mxu0 0.0
        %400 = vmatpush1.msra.mxu0 0.0
        %401 = vmatprep.subr.mxu0 0.0
        %402 = vmatpush1.msra.mxu0 0.0
        %403 = vmatprep.subr.mxu0 0.0
        %404 = vmatpush1.msra.mxu0 0.0
        %405 = vmatprep.subr.mxu0 0.0
        %406 = vmatpush1.msra.mxu0 0.0
        %407 = vmatprep.subr.mxu0 0.0
        %408 = vmatpush1.msra.mxu0 0.0
        %409 = vmatprep.subr.mxu0 0.0
        %410 = vmatpush1.msra.mxu0 0.0
        %411 = vmatprep.mubr.f32.mxu0 0.0
        %412 = vmatmul.mubr.f32.gmra.mrb[0].mxu0 %v345
        %v413 = vpop.f32.mrb[0].mxu0
        %v414 = vadd.f32 %v342, %v413
        %v415 = vpop.f32.mrb[0].mxu0
        %416 = vdwg.mxu0
        %v417 = vld [vmem:[%s1] sm:$0xff]
        %vm418 = vcmask 31744
        %v420 = vsel %vm418, %v417, 0
        %v423 = vsel %vm418, %v414, 0
        %425 = vmatprep.subr.mxu0 0.0
        %426 = vmatpush1.xpose.msra.mxu0 %v423
        %427 = vmatprep.subr.mxu0 0.0
        %428 = vmatpush1.xpose.msra.mxu0 0.0
        %429 = vmatprep.subr.mxu0 0.0
        %430 = vmatpush1.xpose.msra.mxu0 0.0
        %431 = vmatprep.subr.mxu0 0.0
        %432 = vmatpush1.xpose.msra.mxu0 0.0
        %433 = vmatprep.subr.mxu0 0.0
        %434 = vmatpush1.xpose.msra.mxu0 0.0
        %435 = vmatprep.subr.mxu0 0.0
        %436 = vmatpush1.xpose.msra.mxu0 0.0
        %437 = vmatprep.subr.mxu0 0.0
        %438 = vmatpush1.xpose.msra.mxu0 0.0
        %439 = vmatprep.subr.mxu0 0.0
        %440 = vmatpush1.xpose.msra.mxu0 0.0
        %441 = vmatprep.subr.mxu0 0.0
        %442 = vmatpush1.xpose.msra.mxu0 0.0
        %443 = vmatprep.subr.mxu0 0.0
        %444 = vmatpush1.xpose.msra.mxu0 0.0
        %445 = vmatprep.subr.mxu0 0.0
        %446 = vmatpush1.xpose.msra.mxu0 0.0
        %447 = vmatprep.subr.mxu0 0.0
        %448 = vmatpush1.xpose.msra.mxu0 0.0
        %449 = vmatprep.subr.mxu0 0.0
        %450 = vmatpush1.xpose.msra.mxu0 0.0
        %451 = vmatprep.subr.mxu0 0.0
        %452 = vmatpush1.xpose.msra.mxu0 0.0
        %453 = vmatprep.subr.mxu0 0.0
        %454 = vmatpush1.xpose.msra.mxu0 0.0
        %455 = vmatprep.subr.mxu0 0.0
        %456 = vmatpush1.xpose.msra.mxu0 0.0
        %457 = vmatprep.subr.mxu0 0.0
        %458 = vmatpush1.xpose.msra.mxu0 0.0
        %459 = vmatprep.subr.mxu0 0.0
        %460 = vmatpush1.xpose.msra.mxu0 0.0
        %461 = vmatprep.subr.mxu0 0.0
        %462 = vmatpush1.xpose.msra.mxu0 0.0
        %463 = vmatprep.subr.mxu0 0.0
        %464 = vmatpush1.xpose.msra.mxu0 0.0
        %465 = vmatprep.subr.mxu0 0.0
        %466 = vmatpush1.xpose.msra.mxu0 0.0
        %467 = vmatprep.subr.mxu0 0.0
        %468 = vmatpush1.xpose.msra.mxu0 0.0
        %469 = vmatprep.subr.mxu0 0.0
        %470 = vmatpush1.xpose.msra.mxu0 0.0
        %471 = vmatprep.subr.mxu0 0.0
        %472 = vmatpush1.xpose.msra.mxu0 0.0
        %473 = vmatprep.subr.mxu0 0.0
        %474 = vmatpush1.xpose.msra.mxu0 0.0
        %475 = vmatprep.subr.mxu0 0.0
        %476 = vmatpush1.xpose.msra.mxu0 0.0
        %477 = vmatprep.subr.mxu0 0.0
        %478 = vmatpush1.xpose.msra.mxu0 0.0
        %479 = vmatprep.subr.mxu0 0.0
        %480 = vmatpush1.xpose.msra.mxu0 0.0
        %481 = vmatprep.subr.mxu0 0.0
        %482 = vmatpush1.xpose.msra.mxu0 0.0
        %483 = vmatprep.subr.mxu0 0.0
        %484 = vmatpush1.xpose.msra.mxu0 0.0
        %485 = vmatprep.subr.mxu0 0.0
        %486 = vmatpush1.xpose.msra.mxu0 0.0
        %487 = vmatprep.subr.mxu0 0.0
        %488 = vmatpush1.xpose.msra.mxu0 0.0
        %489 = vmatprep.mubr.f32.mxu0 0.0
        %490 = vmatmul.mubr.f32.gmra.mrb[0].mxu0 %v420
        %v491 = vpop.f32.mrb[0].mxu0
        %v492 = vadd.f32 0.0, %v491
        %v493 = vpop.f32.mrb[0].mxu0
        %494 = vdwg.mxu0
        %v495 = vmul.f32 %v492, 0.5
        %vm496 = vcmask 64512
        %v497 = vsel %vm496, %v495, -inf
        %498 = vmax.xlane.f32.xlu0 %v497
        %v499 = vpop.xlane.xlu0 %498
        %v500 = vsub.f32 %v495, %v499
        %v501 = vmul.f32 %v500, 1.442695
        %v502 = vpow.pop %v501
        %v503 = vsel %vm496, %v502, 0.0
        %504 = vadd.xlane.f32.xlu0 %v503
        %v505 = vpop.xlane.xlu0 %504
        %v506 = vrcp.pop %v505
        %v507 = vmul.f32 %v502, %v506
        %508 = vrot.lane.b32.xlu0 %v414, 96
        %v509 = vpop.permute.xlu0 %508
        %v512 = vsel %vm496, %v507, 0
        %514 = vmatprep.subr.mxu0 0.0
        %515 = vmatpush1.msra.mxu0 %v509
        %516 = vmatprep.subr.mxu0 0.0
        %517 = vmatpush1.msra.mxu0 0.0
        %518 = vmatprep.subr.mxu0 0.0
        %519 = vmatpush1.msra.mxu0 0.0
        %520 = vmatprep.subr.mxu0 0.0
        %521 = vmatpush1.msra.mxu0 0.0
        %522 = vmatprep.subr.mxu0 0.0
        %523 = vmatpush1.msra.mxu0 0.0
        %524 = vmatprep.subr.mxu0 0.0
        %525 = vmatpush1.msra.mxu0 0.0
        %526 = vmatprep.subr.mxu0 0.0
        %527 = vmatpush1.msra.mxu0 0.0
        %528 = vmatprep.subr.mxu0 0.0
        %529 = vmatpush1.msra.mxu0 0.0
        %530 = vmatprep.subr.mxu0 0.0
        %531 = vmatpush1.msra.mxu0 0.0
        %532 = vmatprep.subr.mxu0 0.0
        %533 = vmatpush1.msra.mxu0 0.0
        %534 = vmatprep.subr.mxu0 0.0
        %535 = vmatpush1.msra.mxu0 0.0
        %536 = vmatprep.subr.mxu0 0.0
        %537 = vmatpush1.msra.mxu0 0.0
        %538 = vmatprep.subr.mxu0 0.0
        %539 = vmatpush1.msra.mxu0 0.0
        %540 = vmatprep.subr.mxu0 0.0
        %541 = vmatpush1.msra.mxu0 0.0
        %542 = vmatprep.subr.mxu0 0.0
        %543 = vmatpush1.msra.mxu0 0.0
        %544 = vmatprep.subr.mxu0 0.0
        %545 = vmatpush1.msra.mxu0 0.0
        %546 = vmatprep.subr.mxu0 0.0
        %547 = vmatpush1.msra.mxu0 0.0
        %548 = vmatprep.subr.mxu0 0.0
        %549 = vmatpush1.msra.mxu0 0.0
        %550 = vmatprep.subr.mxu0 0.0
        %551 = vmatpush1.msra.mxu0 0.0
        %552 = vmatprep.subr.mxu0 0.0
        %553 = vmatpush1.msra.mxu0 0.0
        %554 = vmatprep.subr.mxu0 0.0
        %555 = vmatpush1.msra.mxu0 0.0
        %556 = vmatprep.subr.mxu0 0.0
        %557 = vmatpush1.msra.mxu0 0.0
        %558 = vmatprep.subr.mxu0 0.0
        %559 = vmatpush1.msra.mxu0 0.0
        %560 = vmatprep.subr.mxu0 0.0
        %561 = vmatpush1.msra.mxu0 0.0
        %562 = vmatprep.subr.mxu0 0.0
        %563 = vmatpush1.msra.mxu0 0.0
        %564 = vmatprep.subr.mxu0 0.0
        %565 = vmatpush1.msra.mxu0 0.0
        %566 = vmatprep.subr.mxu0 0.0
        %567 = vmatpush1.msra.mxu0 0.0
        %568 = vmatprep.subr.mxu0 0.0
        %569 = vmatpush1.msra.mxu0 0.0
        %570 = vmatprep.subr.mxu0 0.0
        %571 = vmatpush1.msra.mxu0 0.0
        %572 = vmatprep.subr.mxu0 0.0
        %573 = vmatpush1.msra.mxu0 0.0
        %574 = vmatprep.subr.mxu0 0.0
        %575 = vmatpush1.msra.mxu0 0.0
        %576 = vmatprep.subr.mxu0 0.0
        %577 = vmatpush1.msra.mxu0 0.0
        %578 = vmatprep.mubr.f32.mxu0 0.0
        %579 = vmatmul.mubr.f32.gmra.mrb[0].mxu0 %v512
        %v580 = vpop.f32.mrb[0].mxu0
        %v581 = vadd.f32 0.0, %v580
        %v582 = vpop.f32.mrb[0].mxu0
        %583 = vdwg.mxu0
        %v584 = vld [vmem:[%s6] sm:$0xf]
        %s585 = scalar_lea.vmem %s1, 8
        %v586 = vld [vmem:[%s585] sm:$0xff]
        %587 = vrot.lane.b32.xlu0 %v414, 124
        %v588 = vpop.permute.xlu0 %587
        %v590 = vsel %vm418, %v586, 0
        %v592 = vsel %vm418, %v588, 0
        %594 = vmatprep.subr.mxu0 0.0
        %595 = vmatpush1.xpose.msra.mxu0 %v592
        %596 = vmatprep.subr.mxu0 0.0
        %597 = vmatpush1.xpose.msra.mxu0 0.0
        %598 = vmatprep.subr.mxu0 0.0
        %599 = vmatpush1.xpose.msra.mxu0 0.0
        %600 = vmatprep.subr.mxu0 0.0
        %601 = vmatpush1.xpose.msra.mxu0 0.0
        %602 = vmatprep.subr.mxu0 0.0
        %603 = vmatpush1.xpose.msra.mxu0 0.0
        %604 = vmatprep.subr.mxu0 0.0
        %605 = vmatpush1.xpose.msra.mxu0 0.0
        %606 = vmatprep.subr.mxu0 0.0
        %607 = vmatpush1.xpose.msra.mxu0 0.0
        %608 = vmatprep.subr.mxu0 0.0
        %609 = vmatpush1.xpose.msra.mxu0 0.0
        %610 = vmatprep.subr.mxu0 0.0
        %611 = vmatpush1.xpose.msra.mxu0 0.0
        %612 = vmatprep.subr.mxu0 0.0
        %613 = vmatpush1.xpose.msra.mxu0 0.0
        %614 = vmatprep.subr.mxu0 0.0
        %615 = vmatpush1.xpose.msra.mxu0 0.0
        %616 = vmatprep.subr.mxu0 0.0
        %617 = vmatpush1.xpose.msra.mxu0 0.0
        %618 = vmatprep.subr.mxu0 0.0
        %619 = vmatpush1.xpose.msra.mxu0 0.0
        %620 = vmatprep.subr.mxu0 0.0
        %621 = vmatpush1.xpose.msra.mxu0 0.0
        %622 = vmatprep.subr.mxu0 0.0
        %623 = vmatpush1.xpose.msra.mxu0 0.0
        %624 = vmatprep.subr.mxu0 0.0
        %625 = vmatpush1.xpose.msra.mxu0 0.0
        %626 = vmatprep.subr.mxu0 0.0
        %627 = vmatpush1.xpose.msra.mxu0 0.0
        %628 = vmatprep.subr.mxu0 0.0
        %629 = vmatpush1.xpose.msra.mxu0 0.0
        %630 = vmatprep.subr.mxu0 0.0
        %631 = vmatpush1.xpose.msra.mxu0 0.0
        %632 = vmatprep.subr.mxu0 0.0
        %633 = vmatpush1.xpose.msra.mxu0 0.0
        %634 = vmatprep.subr.mxu0 0.0
        %635 = vmatpush1.xpose.msra.mxu0 0.0
        %636 = vmatprep.subr.mxu0 0.0
        %637 = vmatpush1.xpose.msra.mxu0 0.0
        %638 = vmatprep.subr.mxu0 0.0
        %639 = vmatpush1.xpose.msra.mxu0 0.0
        %640 = vmatprep.subr.mxu0 0.0
        %641 = vmatpush1.xpose.msra.mxu0 0.0
        %642 = vmatprep.subr.mxu0 0.0
        %643 = vmatpush1.xpose.msra.mxu0 0.0
        %644 = vmatprep.subr.mxu0 0.0
        %645 = vmatpush1.xpose.msra.mxu0 0.0
        %646 = vmatprep.subr.mxu0 0.0
        %647 = vmatpush1.xpose.msra.mxu0 0.0
        %648 = vmatprep.subr.mxu0 0.0
        %649 = vmatpush1.xpose.msra.mxu0 0.0
        %650 = vmatprep.subr.mxu0 0.0
        %651 = vmatpush1.xpose.msra.mxu0 0.0
        %652 = vmatprep.subr.mxu0 0.0
        %653 = vmatpush1.xpose.msra.mxu0 0.0
        %654 = vmatprep.subr.mxu0 0.0
        %655 = vmatpush1.xpose.msra.mxu0 0.0
        %656 = vmatprep.subr.mxu0 0.0
        %657 = vmatpush1.xpose.msra.mxu0 0.0
        %658 = vmatprep.mubr.f32.mxu0 0.0
        %659 = vmatmul.mubr.f32.gmra.mrb[0].mxu0 %v590
        %v660 = vpop.f32.mrb[0].mxu0
        %v661 = vadd.f32 0.0, %v660
        %v662 = vpop.f32.mrb[0].mxu0
        %663 = vdwg.mxu0
        %v664 = vmul.f32 %v661, 0.5
        %v665 = vsel %vm496, %v664, -inf
        %666 = vmax.xlane.f32.xlu0 %v665
        %v667 = vpop.xlane.xlu0 %666
        %v668 = vsub.f32 %v664, %v667
        %v669 = vmul.f32 %v668, 1.442695
        %v670 = vpow.pop %v669
        %v671 = vsel %vm496, %v670, 0.0
        %672 = vadd.xlane.f32.xlu0 %v671
        %v673 = vpop.xlane.xlu0 %672
        %v674 = vrcp.pop %v673
        %v675 = vmul.f32 %v670, %v674
        %676 = vrot.lane.b32.xlu0 %v414, 92
        %v677 = vpop.permute.xlu0 %676
        %v680 = vsel %vm496, %v675, 0
        %682 = vmatprep.subr.mxu0 0.0
        %683 = vmatpush1.msra.mxu0 %v677
        %684 = vmatprep.subr.mxu0 0.0
        %685 = vmatpush1.msra.mxu0 0.0
        %686 = vmatprep.subr.mxu0 0.0
        %687 = vmatpush1.msra.mxu0 0.0
        %688 = vmatprep.subr.mxu0 0.0
        %689 = vmatpush1.msra.mxu0 0.0
        %690 = vmatprep.subr.mxu0 0.0
        %691 = vmatpush1.msra.mxu0 0.0
        %692 = vmatprep.subr.mxu0 0.0
        %693 = vmatpush1.msra.mxu0 0.0
        %694 = vmatprep.subr.mxu0 0.0
        %695 = vmatpush1.msra.mxu0 0.0
        %696 = vmatprep.subr.mxu0 0.0
        %697 = vmatpush1.msra.mxu0 0.0
        %698 = vmatprep.subr.mxu0 0.0
        %699 = vmatpush1.msra.mxu0 0.0
        %700 = vmatprep.subr.mxu0 0.0
        %701 = vmatpush1.msra.mxu0 0.0
        %702 = vmatprep.subr.mxu0 0.0
        %703 = vmatpush1.msra.mxu0 0.0
        %704 = vmatprep.subr.mxu0 0.0
        %705 = vmatpush1.msra.mxu0 0.0
        %706 = vmatprep.subr.mxu0 0.0
        %707 = vmatpush1.msra.mxu0 0.0
        %708 = vmatprep.subr.mxu0 0.0
        %709 = vmatpush1.msra.mxu0 0.0
        %710 = vmatprep.subr.mxu0 0.0
        %711 = vmatpush1.msra.mxu0 0.0
        %712 = vmatprep.subr.mxu0 0.0
        %713 = vmatpush1.msra.mxu0 0.0
        %714 = vmatprep.subr.mxu0 0.0
        %715 = vmatpush1.msra.mxu0 0.0
        %716 = vmatprep.subr.mxu0 0.0
        %717 = vmatpush1.msra.mxu0 0.0
        %718 = vmatprep.subr.mxu0 0.0
        %719 = vmatpush1.msra.mxu0 0.0
        %720 = vmatprep.subr.mxu0 0.0
        %721 = vmatpush1.msra.mxu0 0.0
        %722 = vmatprep.subr.mxu0 0.0
        %723 = vmatpush1.msra.mxu0 0.0
        %724 = vmatprep.subr.mxu0 0.0
        %725 = vmatpush1.msra.mxu0 0.0
        %726 = vmatprep.subr.mxu0 0.0
        %727 = vmatpush1.msra.mxu0 0.0
        %728 = vmatprep.subr.mxu0 0.0
        %729 = vmatpush1.msra.mxu0 0.0
        %730 = vmatprep.subr.mxu0 0.0
        %731 = vmatpush1.msra.mxu0 0.0
        %732 = vmatprep.subr.mxu0 0.0
        %733 = vmatpush1.msra.mxu0 0.0
        %734 = vmatprep.subr.mxu0 0.0
        %735 = vmatpush1.msra.mxu0 0.0
        %736 = vmatprep.subr.mxu0 0.0
        %737 = vmatpush1.msra.mxu0 0.0
        %738 = vmatprep.subr.mxu0 0.0
        %739 = vmatpush1.msra.mxu0 0.0
        %740 = vmatprep.subr.mxu0 0.0
        %741 = vmatpush1.msra.mxu0 0.0
        %742 = vmatprep.subr.mxu0 0.0
        %743 = vmatpush1.msra.mxu0 0.0
        %744 = vmatprep.subr.mxu0 0.0
        %745 = vmatpush1.msra.mxu0 0.0
        %746 = vmatprep.mubr.f32.mxu0 0.0
        %747 = vmatmul.mubr.f32.gmra.mrb[0].mxu0 %v680
        %v748 = vpop.f32.mrb[0].mxu0
        %v749 = vadd.f32 0.0, %v748
        %v750 = vpop.f32.mrb[0].mxu0
        %751 = vdwg.mxu0
        %s752 = scalar_lea.vmem %s6, 4
        %v753 = vld [vmem:[%s752] sm:$0xf]
        %v755 = vsel %vm418, %v749, 0
        %vm757 = vcmask 1043456
        %v759 = vsel %vm757, %v753, 0
        %761 = vmatprep.subr.mxu0 0.0
        %762 = vmatpush1.msra.mxu0 %v759
        %763 = vmatprep.subr.mxu0 0.0
        %764 = vmatpush1.msra.mxu0 0.0
        %765 = vmatprep.subr.mxu0 0.0
        %766 = vmatpush1.msra.mxu0 0.0
        %767 = vmatprep.subr.mxu0 0.0
        %768 = vmatpush1.msra.mxu0 0.0
        %769 = vmatprep.subr.mxu0 0.0
        %770 = vmatpush1.msra.mxu0 0.0
        %771 = vmatprep.subr.mxu0 0.0
        %772 = vmatpush1.msra.mxu0 0.0
        %773 = vmatprep.subr.mxu0 0.0
        %774 = vmatpush1.msra.mxu0 0.0
        %775 = vmatprep.subr.mxu0 0.0
        %776 = vmatpush1.msra.mxu0 0.0
        %777 = vmatprep.subr.mxu0 0.0
        %778 = vmatpush1.msra.mxu0 0.0
        %779 = vmatprep.subr.mxu0 0.0
        %780 = vmatpush1.msra.mxu0 0.0
        %781 = vmatprep.subr.mxu0 0.0
        %782 = vmatpush1.msra.mxu0 0.0
        %783 = vmatprep.subr.mxu0 0.0
        %784 = vmatpush1.msra.mxu0 0.0
        %785 = vmatprep.subr.mxu0 0.0
        %786 = vmatpush1.msra.mxu0 0.0
        %787 = vmatprep.subr.mxu0 0.0
        %788 = vmatpush1.msra.mxu0 0.0
        %789 = vmatprep.subr.mxu0 0.0
        %790 = vmatpush1.msra.mxu0 0.0
        %791 = vmatprep.subr.mxu0 0.0
        %792 = vmatpush1.msra.mxu0 0.0
        %793 = vmatprep.subr.mxu0 0.0
        %794 = vmatpush1.msra.mxu0 0.0
        %795 = vmatprep.subr.mxu0 0.0
        %796 = vmatpush1.msra.mxu0 0.0
        %797 = vmatprep.subr.mxu0 0.0
        %798 = vmatpush1.msra.mxu0 0.0
        %799 = vmatprep.subr.mxu0 0.0
        %800 = vmatpush1.msra.mxu0 0.0
        %801 = vmatprep.subr.mxu0 0.0
        %802 = vmatpush1.msra.mxu0 0.0
        %803 = vmatprep.subr.mxu0 0.0
        %804 = vmatpush1.msra.mxu0 0.0
        %805 = vmatprep.subr.mxu0 0.0
        %806 = vmatpush1.msra.mxu0 0.0
        %807 = vmatprep.subr.mxu0 0.0
        %808 = vmatpush1.msra.mxu0 0.0
        %809 = vmatprep.subr.mxu0 0.0
        %810 = vmatpush1.msra.mxu0 0.0
        %811 = vmatprep.subr.mxu0 0.0
        %812 = vmatpush1.msra.mxu0 0.0
        %813 = vmatprep.subr.mxu0 0.0
        %814 = vmatpush1.msra.mxu0 0.0
        %815 = vmatprep.subr.mxu0 0.0
        %816 = vmatpush1.msra.mxu0 0.0
        %817 = vmatprep.subr.mxu0 0.0
        %818 = vmatpush1.msra.mxu0 0.0
        %819 = vmatprep.subr.mxu0 0.0
        %820 = vmatpush1.msra.mxu0 0.0
        %821 = vmatprep.subr.mxu0 0.0
        %822 = vmatpush1.msra.mxu0 0.0
        %823 = vmatprep.subr.mxu0 0.0
        %824 = vmatpush1.msra.mxu0 0.0
        %825 = vmatprep.mubr.f32.mxu0 0.0
        %826 = vmatmul.mubr.f32.gmra.mrb[0].mxu0 %v755
        %v827 = vpop.f32.mrb[0].mxu0
        %v828 = vadd.f32 0.0, %v827
        %v829 = vpop.f32.mrb[0].mxu0
        %830 = vdwg.mxu0
        %v832 = vsel %vm418, %v581, 0
        %v835 = vsel %vm757, %v584, 0
        %837 = vmatprep.subr.mxu0 0.0
        %838 = vmatpush1.msra.mxu0 %v835
        %839 = vmatprep.subr.mxu0 0.0
        %840 = vmatpush1.msra.mxu0 0.0
        %841 = vmatprep.subr.mxu0 0.0
        %842 = vmatpush1.msra.mxu0 0.0
        %843 = vmatprep.subr.mxu0 0.0
        %844 = vmatpush1.msra.mxu0 0.0
        %845 = vmatprep.subr.mxu0 0.0
        %846 = vmatpush1.msra.mxu0 0.0
        %847 = vmatprep.subr.mxu0 0.0
        %848 = vmatpush1.msra.mxu0 0.0
        %849 = vmatprep.subr.mxu0 0.0
        %850 = vmatpush1.msra.mxu0 0.0
        %851 = vmatprep.subr.mxu0 0.0
        %852 = vmatpush1.msra.mxu0 0.0
        %853 = vmatprep.subr.mxu0 0.0
        %854 = vmatpush1.msra.mxu0 0.0
        %855 = vmatprep.subr.mxu0 0.0
        %856 = vmatpush1.msra.mxu0 0.0
        %857 = vmatprep.subr.mxu0 0.0
        %858 = vmatpush1.msra.mxu0 0.0
        %859 = vmatprep.subr.mxu0 0.0
        %860 = vmatpush1.msra.mxu0 0.0
        %861 = vmatprep.subr.mxu0 0.0
        %862 = vmatpush1.msra.mxu0 0.0
        %863 = vmatprep.subr.mxu0 0.0
        %864 = vmatpush1.msra.mxu0 0.0
        %865 = vmatprep.subr.mxu0 0.0
        %866 = vmatpush1.msra.mxu0 0.0
        %867 = vmatprep.subr.mxu0 0.0
        %868 = vmatpush1.msra.mxu0 0.0
        %869 = vmatprep.subr.mxu0 0.0
        %870 = vmatpush1.msra.mxu0 0.0
        %871 = vmatprep.subr.mxu0 0.0
        %872 = vmatpush1.msra.mxu0 0.0
        %873 = vmatprep.subr.mxu0 0.0
        %874 = vmatpush1.msra.mxu0 0.0
        %875 = vmatprep.subr.mxu0 0.0
        %876 = vmatpush1.msra.mxu0 0.0
        %877 = vmatprep.subr.mxu0 0.0
        %878 = vmatpush1.msra.mxu0 0.0
        %879 = vmatprep.subr.mxu0 0.0
        %880 = vmatpush1.msra.mxu0 0.0
        %881 = vmatprep.subr.mxu0 0.0
        %882 = vmatpush1.msra.mxu0 0.0
        %883 = vmatprep.subr.mxu0 0.0
        %884 = vmatpush1.msra.mxu0 0.0
        %885 = vmatprep.subr.mxu0 0.0
        %886 = vmatpush1.msra.mxu0 0.0
        %887 = vmatprep.subr.mxu0 0.0
        %888 = vmatpush1.msra.mxu0 0.0
        %889 = vmatprep.subr.mxu0 0.0
        %890 = vmatpush1.msra.mxu0 0.0
        %891 = vmatprep.subr.mxu0 0.0
        %892 = vmatpush1.msra.mxu0 0.0
        %893 = vmatprep.subr.mxu0 0.0
        %894 = vmatpush1.msra.mxu0 0.0
        %895 = vmatprep.subr.mxu0 0.0
        %896 = vmatpush1.msra.mxu0 0.0
        %897 = vmatprep.subr.mxu0 0.0
        %898 = vmatpush1.msra.mxu0 0.0
        %899 = vmatprep.subr.mxu0 0.0
        %900 = vmatpush1.msra.mxu0 0.0
        %901 = vmatprep.mubr.f32.mxu0 0.0
        %902 = vmatmul.mubr.f32.gmra.mrb[0].mxu0 %v832
        %v903 = vpop.f32.mrb[0].mxu0
        %v904 = vadd.f32 %v828, %v903
        %v905 = vpop.f32.mrb[0].mxu0
        %906 = vdwg.mxu0
        %s907 = scalar_lea.vmem %s1, 16
        %v908 = vld [vmem:[%s907] sm:$0xff]
        %909 = vrot.lane.b32.xlu0 %v414, 120
        %v910 = vpop.permute.xlu0 %909
        %v912 = vsel %vm418, %v908, 0
        %v914 = vsel %vm418, %v910, 0
        %916 = vmatprep.subr.mxu0 0.0
        %917 = vmatpush1.xpose.msra.mxu0 %v914
        %918 = vmatprep.subr.mxu0 0.0
        %919 = vmatpush1.xpose.msra.mxu0 0.0
        %920 = vmatprep.subr.mxu0 0.0
        %921 = vmatpush1.xpose.msra.mxu0 0.0
        %922 = vmatprep.subr.mxu0 0.0
        %923 = vmatpush1.xpose.msra.mxu0 0.0
        %924 = vmatprep.subr.mxu0 0.0
        %925 = vmatpush1.xpose.msra.mxu0 0.0
        %926 = vmatprep.subr.mxu0 0.0
        %927 = vmatpush1.xpose.msra.mxu0 0.0
        %928 = vmatprep.subr.mxu0 0.0
        %929 = vmatpush1.xpose.msra.mxu0 0.0
        %930 = vmatprep.subr.mxu0 0.0
        %931 = vmatpush1.xpose.msra.mxu0 0.0
        %932 = vmatprep.subr.mxu0 0.0
        %933 = vmatpush1.xpose.msra.mxu0 0.0
        %934 = vmatprep.subr.mxu0 0.0
        %935 = vmatpush1.xpose.msra.mxu0 0.0
        %936 = vmatprep.subr.mxu0 0.0
        %937 = vmatpush1.xpose.msra.mxu0 0.0
        %938 = vmatprep.subr.mxu0 0.0
        %939 = vmatpush1.xpose.msra.mxu0 0.0
        %940 = vmatprep.subr.mxu0 0.0
        %941 = vmatpush1.xpose.msra.mxu0 0.0
        %942 = vmatprep.subr.mxu0 0.0
        %943 = vmatpush1.xpose.msra.mxu0 0.0
        %944 = vmatprep.subr.mxu0 0.0
        %945 = vmatpush1.xpose.msra.mxu0 0.0
        %946 = vmatprep.subr.mxu0 0.0
        %947 = vmatpush1.xpose.msra.mxu0 0.0
        %948 = vmatprep.subr.mxu0 0.0
        %949 = vmatpush1.xpose.msra.mxu0 0.0
        %950 = vmatprep.subr.mxu0 0.0
        %951 = vmatpush1.xpose.msra.mxu0 0.0
        %952 = vmatprep.subr.mxu0 0.0
        %953 = vmatpush1.xpose.msra.mxu0 0.0
        %954 = vmatprep.subr.mxu0 0.0
        %955 = vmatpush1.xpose.msra.mxu0 0.0
        %956 = vmatprep.subr.mxu0 0.0
        %957 = vmatpush1.xpose.msra.mxu0 0.0
        %958 = vmatprep.subr.mxu0 0.0
        %959 = vmatpush1.xpose.msra.mxu0 0.0
        %960 = vmatprep.subr.mxu0 0.0
        %961 = vmatpush1.xpose.msra.mxu0 0.0
        %962 = vmatprep.subr.mxu0 0.0
        %963 = vmatpush1.xpose.msra.mxu0 0.0
        %964 = vmatprep.subr.mxu0 0.0
        %965 = vmatpush1.xpose.msra.mxu0 0.0
        %966 = vmatprep.subr.mxu0 0.0
        %967 = vmatpush1.xpose.msra.mxu0 0.0
        %968 = vmatprep.subr.mxu0 0.0
        %969 = vmatpush1.xpose.msra.mxu0 0.0
        %970 = vmatprep.subr.mxu0 0.0
        %971 = vmatpush1.xpose.msra.mxu0 0.0
        %972 = vmatprep.subr.mxu0 0.0
        %973 = vmatpush1.xpose.msra.mxu0 0.0
        %974 = vmatprep.subr.mxu0 0.0
        %975 = vmatpush1.xpose.msra.mxu0 0.0
        %976 = vmatprep.subr.mxu0 0.0
        %977 = vmatpush1.xpose.msra.mxu0 0.0
        %978 = vmatprep.subr.mxu0 0.0
        %979 = vmatpush1.xpose.msra.mxu0 0.0
        %980 = vmatprep.mubr.f32.mxu0 0.0
        %981 = vmatmul.mubr.f32.gmra.mrb[0].mxu0 %v912
        %v982 = vpop.f32.mrb[0].mxu0
        %v983 = vadd.f32 0.0, %v982
        %v984 = vpop.f32.mrb[0].mxu0
        %985 = vdwg.mxu0
        %v986 = vmul.f32 %v983, 0.5
        %v987 = vsel %vm496, %v986, -inf
        %988 = vmax.xlane.f32.xlu0 %v987
        %v989 = vpop.xlane.xlu0 %988
        %v990 = vsub.f32 %v986, %v989
        %v991 = vmul.f32 %v990, 1.442695
        %v992 = vpow.pop %v991
        %v993 = vsel %vm496, %v992, 0.0
        %994 = vadd.xlane.f32.xlu0 %v993
        %v995 = vpop.xlane.xlu0 %994
        %v996 = vrcp.pop %v995
        %v997 = vmul.f32 %v992, %v996
        %998 = vrot.lane.b32.xlu0 %v414, 88
        %v999 = vpop.permute.xlu0 %998
        %v1002 = vsel %vm496, %v997, 0
        %1004 = vmatprep.subr.mxu0 0.0
        %1005 = vmatpush1.msra.mxu0 %v999
        %1006 = vmatprep.subr.mxu0 0.0
        %1007 = vmatpush1.msra.mxu0 0.0
        %1008 = vmatprep.subr.mxu0 0.0
        %1009 = vmatpush1.msra.mxu0 0.0
        %1010 = vmatprep.subr.mxu0 0.0
        %1011 = vmatpush1.msra.mxu0 0.0
        %1012 = vmatprep.subr.mxu0 0.0
        %1013 = vmatpush1.msra.mxu0 0.0
        %1014 = vmatprep.subr.mxu0 0.0
        %1015 = vmatpush1.msra.mxu0 0.0
        %1016 = vmatprep.subr.mxu0 0.0
        %1017 = vmatpush1.msra.mxu0 0.0
        %1018 = vmatprep.subr.mxu0 0.0
        %1019 = vmatpush1.msra.mxu0 0.0
        %1020 = vmatprep.subr.mxu0 0.0
        %1021 = vmatpush1.msra.mxu0 0.0
        %1022 = vmatprep.subr.mxu0 0.0
        %1023 = vmatpush1.msra.mxu0 0.0
        %1024 = vmatprep.subr.mxu0 0.0
        %1025 = vmatpush1.msra.mxu0 0.0
        %1026 = vmatprep.subr.mxu0 0.0
        %1027 = vmatpush1.msra.mxu0 0.0
        %1028 = vmatprep.subr.mxu0 0.0
        %1029 = vmatpush1.msra.mxu0 0.0
        %1030 = vmatprep.subr.mxu0 0.0
        %1031 = vmatpush1.msra.mxu0 0.0
        %1032 = vmatprep.subr.mxu0 0.0
        %1033 = vmatpush1.msra.mxu0 0.0
        %1034 = vmatprep.subr.mxu0 0.0
        %1035 = vmatpush1.msra.mxu0 0.0
        %1036 = vmatprep.subr.mxu0 0.0
        %1037 = vmatpush1.msra.mxu0 0.0
        %1038 = vmatprep.subr.mxu0 0.0
        %1039 = vmatpush1.msra.mxu0 0.0
        %1040 = vmatprep.subr.mxu0 0.0
        %1041 = vmatpush1.msra.mxu0 0.0
        %1042 = vmatprep.subr.mxu0 0.0
        %1043 = vmatpush1.msra.mxu0 0.0
        %1044 = vmatprep.subr.mxu0 0.0
        %1045 = vmatpush1.msra.mxu0 0.0
        %1046 = vmatprep.subr.mxu0 0.0
        %1047 = vmatpush1.msra.mxu0 0.0
        %1048 = vmatprep.subr.mxu0 0.0
        %1049 = vmatpush1.msra.mxu0 0.0
        %1050 = vmatprep.subr.mxu0 0.0
        %1051 = vmatpush1.msra.mxu0 0.0
        %1052 = vmatprep.subr.mxu0 0.0
        %1053 = vmatpush1.msra.mxu0 0.0
        %1054 = vmatprep.subr.mxu0 0.0
        %1055 = vmatpush1.msra.mxu0 0.0
        %1056 = vmatprep.subr.mxu0 0.0
        %1057 = vmatpush1.msra.mxu0 0.0
        %1058 = vmatprep.subr.mxu0 0.0
        %1059 = vmatpush1.msra.mxu0 0.0
        %1060 = vmatprep.subr.mxu0 0.0
        %1061 = vmatpush1.msra.mxu0 0.0
        %1062 = vmatprep.subr.mxu0 0.0
        %1063 = vmatpush1.msra.mxu0 0.0
        %1064 = vmatprep.subr.mxu0 0.0
        %1065 = vmatpush1.msra.mxu0 0.0
        %1066 = vmatprep.subr.mxu0 0.0
        %1067 = vmatpush1.msra.mxu0 0.0
        %1068 = vmatprep.mubr.f32.mxu0 0.0
        %1069 = vmatmul.mubr.f32.gmra.mrb[0].mxu0 %v1002
        %v1070 = vpop.f32.mrb[0].mxu0
        %v1071 = vadd.f32 0.0, %v1070
        %v1072 = vpop.f32.mrb[0].mxu0
        %1073 = vdwg.mxu0
        %s1074 = scalar_lea.vmem %s6, 8
        %v1075 = vld [vmem:[%s1074] sm:$0xf]
        %v1077 = vsel %vm418, %v1071, 0
        %v1080 = vsel %vm757, %v1075, 0
        %1082 = vmatprep.subr.mxu0 0.0
        %1083 = vmatpush1.msra.mxu0 %v1080
        %1084 = vmatprep.subr.mxu0 0.0
        %1085 = vmatpush1.msra.mxu0 0.0
        %1086 = vmatprep.subr.mxu0 0.0
        %1087 = vmatpush1.msra.mxu0 0.0
        %1088 = vmatprep.subr.mxu0 0.0
        %1089 = vmatpush1.msra.mxu0 0.0
        %1090 = vmatprep.subr.mxu0 0.0
        %1091 = vmatpush1.msra.mxu0 0.0
        %1092 = vmatprep.subr.mxu0 0.0
        %1093 = vmatpush1.msra.mxu0 0.0
        %1094 = vmatprep.subr.mxu0 0.0
        %1095 = vmatpush1.msra.mxu0 0.0
        %1096 = vmatprep.subr.mxu0 0.0
        %1097 = vmatpush1.msra.mxu0 0.0
        %1098 = vmatprep.subr.mxu0 0.0
        %1099 = vmatpush1.msra.mxu0 0.0
        %1100 = vmatprep.subr.mxu0 0.0
        %1101 = vmatpush1.msra.mxu0 0.0
        %1102 = vmatprep.subr.mxu0 0.0
        %1103 = vmatpush1.msra.mxu0 0.0
        %1104 = vmatprep.subr.mxu0 0.0
        %1105 = vmatpush1.msra.mxu0 0.0
        %1106 = vmatprep.subr.mxu0 0.0
        %1107 = vmatpush1.msra.mxu0 0.0
        %1108 = vmatprep.subr.mxu0 0.0
        %1109 = vmatpush1.msra.mxu0 0.0
        %1110 = vmatprep.subr.mxu0 0.0
        %1111 = vmatpush1.msra.mxu0 0.0
        %1112 = vmatprep.subr.mxu0 0.0
        %1113 = vmatpush1.msra.mxu0 0.0
        %1114 = vmatprep.subr.mxu0 0.0
        %1115 = vmatpush1.msra.mxu0 0.0
        %1116 = vmatprep.subr.mxu0 0.0
        %1117 = vmatpush1.msra.mxu0 0.0
        %1118 = vmatprep.subr.mxu0 0.0
        %1119 = vmatpush1.msra.mxu0 0.0
        %1120 = vmatprep.subr.mxu0 0.0
        %1121 = vmatpush1.msra.mxu0 0.0
        %1122 = vmatprep.subr.mxu0 0.0
        %1123 = vmatpush1.msra.mxu0 0.0
        %1124 = vmatprep.subr.mxu0 0.0
        %1125 = vmatpush1.msra.mxu0 0.0
        %1126 = vmatprep.subr.mxu0 0.0
        %1127 = vmatpush1.msra.mxu0 0.0
        %1128 = vmatprep.subr.mxu0 0.0
        %1129 = vmatpush1.msra.mxu0 0.0
        %1130 = vmatprep.subr.mxu0 0.0
        %1131 = vmatpush1.msra.mxu0 0.0
        %1132 = vmatprep.subr.mxu0 0.0
        %1133 = vmatpush1.msra.mxu0 0.0
        %1134 = vmatprep.subr.mxu0 0.0
        %1135 = vmatpush1.msra.mxu0 0.0
        %1136 = vmatprep.subr.mxu0 0.0
        %1137 = vmatpush1.msra.mxu0 0.0
        %1138 = vmatprep.subr.mxu0 0.0
        %1139 = vmatpush1.msra.mxu0 0.0
        %1140 = vmatprep.subr.mxu0 0.0
        %1141 = vmatpush1.msra.mxu0 0.0
        %1142 = vmatprep.subr.mxu0 0.0
        %1143 = vmatpush1.msra.mxu0 0.0
        %1144 = vmatprep.subr.mxu0 0.0
        %1145 = vmatpush1.msra.mxu0 0.0
        %1146 = vmatprep.mubr.f32.mxu0 0.0
        %1147 = vmatmul.mubr.f32.gmra.mrb[0].mxu0 %v1077
        %v1148 = vpop.f32.mrb[0].mxu0
        %v1149 = vadd.f32 0.0, %v1148
        %v1150 = vpop.f32.mrb[0].mxu0
        %1151 = vdwg.mxu0
        %v1152 = vadd.f32 %v904, %v1149
        %s1153 = scalar_lea.vmem %s1, 24
        %v1154 = vld [vmem:[%s1153] sm:$0xff]
        %1155 = vrot.lane.b32.xlu0 %v414, 116
        %v1156 = vpop.permute.xlu0 %1155
        %v1158 = vsel %vm418, %v1154, 0
        %v1160 = vsel %vm418, %v1156, 0
        %1162 = vmatprep.subr.mxu0 0.0
        %1163 = vmatpush1.xpose.msra.mxu0 %v1160
        %1164 = vmatprep.subr.mxu0 0.0
        %1165 = vmatpush1.xpose.msra.mxu0 0.0
        %1166 = vmatprep.subr.mxu0 0.0
        %1167 = vmatpush1.xpose.msra.mxu0 0.0
        %1168 = vmatprep.subr.mxu0 0.0
        %1169 = vmatpush1.xpose.msra.mxu0 0.0
        %1170 = vmatprep.subr.mxu0 0.0
        %1171 = vmatpush1.xpose.msra.mxu0 0.0
        %1172 = vmatprep.subr.mxu0 0.0
        %1173 = vmatpush1.xpose.msra.mxu0 0.0
        %1174 = vmatprep.subr.mxu0 0.0
        %1175 = vmatpush1.xpose.msra.mxu0 0.0
        %1176 = vmatprep.subr.mxu0 0.0
        %1177 = vmatpush1.xpose.msra.mxu0 0.0
        %1178 = vmatprep.subr.mxu0 0.0
        %1179 = vmatpush1.xpose.msra.mxu0 0.0
        %1180 = vmatprep.subr.mxu0 0.0
        %1181 = vmatpush1.xpose.msra.mxu0 0.0
        %1182 = vmatprep.subr.mxu0 0.0
        %1183 = vmatpush1.xpose.msra.mxu0 0.0
        %1184 = vmatprep.subr.mxu0 0.0
        %1185 = vmatpush1.xpose.msra.mxu0 0.0
        %1186 = vmatprep.subr.mxu0 0.0
        %1187 = vmatpush1.xpose.msra.mxu0 0.0
        %1188 = vmatprep.subr.mxu0 0.0
        %1189 = vmatpush1.xpose.msra.mxu0 0.0
        %1190 = vmatprep.subr.mxu0 0.0
        %1191 = vmatpush1.xpose.msra.mxu0 0.0
        %1192 = vmatprep.subr.mxu0 0.0
        %1193 = vmatpush1.xpose.msra.mxu0 0.0
        %1194 = vmatprep.subr.mxu0 0.0
        %1195 = vmatpush1.xpose.msra.mxu0 0.0
        %1196 = vmatprep.subr.mxu0 0.0
        %1197 = vmatpush1.xpose.msra.mxu0 0.0
        %1198 = vmatprep.subr.mxu0 0.0
        %1199 = vmatpush1.xpose.msra.mxu0 0.0
        %1200 = vmatprep.subr.mxu0 0.0
        %1201 = vmatpush1.xpose.msra.mxu0 0.0
        %1202 = vmatprep.subr.mxu0 0.0
        %1203 = vmatpush1.xpose.msra.mxu0 0.0
        %1204 = vmatprep.subr.mxu0 0.0
        %1205 = vmatpush1.xpose.msra.mxu0 0.0
        %1206 = vmatprep.subr.mxu0 0.0
        %1207 = vmatpush1.xpose.msra.mxu0 0.0
        %1208 = vmatprep.subr.mxu0 0.0
        %1209 = vmatpush1.xpose.msra.mxu0 0.0
        %1210 = vmatprep.subr.mxu0 0.0
        %1211 = vmatpush1.xpose.msra.mxu0 0.0
        %1212 = vmatprep.subr.mxu0 0.0
        %1213 = vmatpush1.xpose.msra.mxu0 0.0
        %1214 = vmatprep.subr.mxu0 0.0
        %1215 = vmatpush1.xpose.msra.mxu0 0.0
        %1216 = vmatprep.subr.mxu0 0.0
        %1217 = vmatpush1.xpose.msra.mxu0 0.0
        %1218 = vmatprep.subr.mxu0 0.0
        %1219 = vmatpush1.xpose.msra.mxu0 0.0
        %1220 = vmatprep.subr.mxu0 0.0
        %1221 = vmatpush1.xpose.msra.mxu0 0.0
        %1222 = vmatprep.subr.mxu0 0.0
        %1223 = vmatpush1.xpose.msra.mxu0 0.0
        %1224 = vmatprep.subr.mxu0 0.0
        %1225 = vmatpush1.xpose.msra.mxu0 0.0
        %1226 = vmatprep.mubr.f32.mxu0 0.0
        %1227 = vmatmul.mubr.f32.gmra.mrb[0].mxu0 %v1158
        %v1228 = vpop.f32.mrb[0].mxu0
        %v1229 = vadd.f32 0.0, %v1228
        %v1230 = vpop.f32.mrb[0].mxu0
        %1231 = vdwg.mxu0
        %v1232 = vmul.f32 %v1229, 0.5
        %v1233 = vsel %vm496, %v1232, -inf
        %1234 = vmax.xlane.f32.xlu0 %v1233
        %v1235 = vpop.xlane.xlu0 %1234
        %v1236 = vsub.f32 %v1232, %v1235
        %v1237 = vmul.f32 %v1236, 1.442695
        %v1238 = vpow.pop %v1237
        %v1239 = vsel %vm496, %v1238, 0.0
        %1240 = vadd.xlane.f32.xlu0 %v1239
        %v1241 = vpop.xlane.xlu0 %1240
        %v1242 = vrcp.pop %v1241
        %v1243 = vmul.f32 %v1238, %v1242
        %1244 = vrot.lane.b32.xlu0 %v414, 84
        %v1245 = vpop.permute.xlu0 %1244
        %v1248 = vsel %vm496, %v1243, 0
        %1250 = vmatprep.subr.mxu0 0.0
        %1251 = vmatpush1.msra.mxu0 %v1245
        %1252 = vmatprep.subr.mxu0 0.0
        %1253 = vmatpush1.msra.mxu0 0.0
        %1254 = vmatprep.subr.mxu0 0.0
        %1255 = vmatpush1.msra.mxu0 0.0
        %1256 = vmatprep.subr.mxu0 0.0
        %1257 = vmatpush1.msra.mxu0 0.0
        %1258 = vmatprep.subr.mxu0 0.0
        %1259 = vmatpush1.msra.mxu0 0.0
        %1260 = vmatprep.subr.mxu0 0.0
        %1261 = vmatpush1.msra.mxu0 0.0
        %1262 = vmatprep.subr.mxu0 0.0
        %1263 = vmatpush1.msra.mxu0 0.0
        %1264 = vmatprep.subr.mxu0 0.0
        %1265 = vmatpush1.msra.mxu0 0.0
        %1266 = vmatprep.subr.mxu0 0.0
        %1267 = vmatpush1.msra.mxu0 0.0
        %1268 = vmatprep.subr.mxu0 0.0
        %1269 = vmatpush1.msra.mxu0 0.0
        %1270 = vmatprep.subr.mxu0 0.0
        %1271 = vmatpush1.msra.mxu0 0.0
        %1272 = vmatprep.subr.mxu0 0.0
        %1273 = vmatpush1.msra.mxu0 0.0
        %1274 = vmatprep.subr.mxu0 0.0
        %1275 = vmatpush1.msra.mxu0 0.0
        %1276 = vmatprep.subr.mxu0 0.0
        %1277 = vmatpush1.msra.mxu0 0.0
        %1278 = vmatprep.subr.mxu0 0.0
        %1279 = vmatpush1.msra.mxu0 0.0
        %1280 = vmatprep.subr.mxu0 0.0
        %1281 = vmatpush1.msra.mxu0 0.0
        %1282 = vmatprep.subr.mxu0 0.0
        %1283 = vmatpush1.msra.mxu0 0.0
        %1284 = vmatprep.subr.mxu0 0.0
        %1285 = vmatpush1.msra.mxu0 0.0
        %1286 = vmatprep.subr.mxu0 0.0
        %1287 = vmatpush1.msra.mxu0 0.0
        %1288 = vmatprep.subr.mxu0 0.0
        %1289 = vmatpush1.msra.mxu0 0.0
        %1290 = vmatprep.subr.mxu0 0.0
        %1291 = vmatpush1.msra.mxu0 0.0
        %1292 = vmatprep.subr.mxu0 0.0
        %1293 = vmatpush1.msra.mxu0 0.0
        %1294 = vmatprep.subr.mxu0 0.0
        %1295 = vmatpush1.msra.mxu0 0.0
        %1296 = vmatprep.subr.mxu0 0.0
        %1297 = vmatpush1.msra.mxu0 0.0
        %1298 = vmatprep.subr.mxu0 0.0
        %1299 = vmatpush1.msra.mxu0 0.0
        %1300 = vmatprep.subr.mxu0 0.0
        %1301 = vmatpush1.msra.mxu0 0.0
        %1302 = vmatprep.subr.mxu0 0.0
        %1303 = vmatpush1.msra.mxu0 0.0
        %1304 = vmatprep.subr.mxu0 0.0
        %1305 = vmatpush1.msra.mxu0 0.0
        %1306 = vmatprep.subr.mxu0 0.0
        %1307 = vmatpush1.msra.mxu0 0.0
        %1308 = vmatprep.subr.mxu0 0.0
        %1309 = vmatpush1.msra.mxu0 0.0
        %1310 = vmatprep.subr.mxu0 0.0
        %1311 = vmatpush1.msra.mxu0 0.0
        %1312 = vmatprep.subr.mxu0 0.0
        %1313 = vmatpush1.msra.mxu0 0.0
        %1314 = vmatprep.mubr.f32.mxu0 0.0
        %1315 = vmatmul.mubr.f32.gmra.mrb[0].mxu0 %v1248
        %v1316 = vpop.f32.mrb[0].mxu0
        %v1317 = vadd.f32 0.0, %v1316
        %v1318 = vpop.f32.mrb[0].mxu0
        %1319 = vdwg.mxu0
        %s1320 = scalar_lea.vmem %s6, 12
        %v1321 = vld [vmem:[%s1320] sm:$0xf]
        %v1323 = vsel %vm418, %v1317, 0
        %v1326 = vsel %vm757, %v1321, 0
        %1328 = vmatprep.subr.mxu0 0.0
        %1329 = vmatpush1.msra.mxu0 %v1326
        %1330 = vmatprep.subr.mxu0 0.0
        %1331 = vmatpush1.msra.mxu0 0.0
        %1332 = vmatprep.subr.mxu0 0.0
        %1333 = vmatpush1.msra.mxu0 0.0
        %1334 = vmatprep.subr.mxu0 0.0
        %1335 = vmatpush1.msra.mxu0 0.0
        %1336 = vmatprep.subr.mxu0 0.0
        %1337 = vmatpush1.msra.mxu0 0.0
        %1338 = vmatprep.subr.mxu0 0.0
        %1339 = vmatpush1.msra.mxu0 0.0
        %1340 = vmatprep.subr.mxu0 0.0
        %1341 = vmatpush1.msra.mxu0 0.0
        %1342 = vmatprep.subr.mxu0 0.0
        %1343 = vmatpush1.msra.mxu0 0.0
        %1344 = vmatprep.subr.mxu0 0.0
        %1345 = vmatpush1.msra.mxu0 0.0
        %1346 = vmatprep.subr.mxu0 0.0
        %1347 = vmatpush1.msra.mxu0 0.0
        %1348 = vmatprep.subr.mxu0 0.0
        %1349 = vmatpush1.msra.mxu0 0.0
        %1350 = vmatprep.subr.mxu0 0.0
        %1351 = vmatpush1.msra.mxu0 0.0
        %1352 = vmatprep.subr.mxu0 0.0
        %1353 = vmatpush1.msra.mxu0 0.0
        %1354 = vmatprep.subr.mxu0 0.0
        %1355 = vmatpush1.msra.mxu0 0.0
        %1356 = vmatprep.subr.mxu0 0.0
        %1357 = vmatpush1.msra.mxu0 0.0
        %1358 = vmatprep.subr.mxu0 0.0
        %1359 = vmatpush1.msra.mxu0 0.0
        %1360 = vmatprep.subr.mxu0 0.0
        %1361 = vmatpush1.msra.mxu0 0.0
        %1362 = vmatprep.subr.mxu0 0.0
        %1363 = vmatpush1.msra.mxu0 0.0
        %1364 = vmatprep.subr.mxu0 0.0
        %1365 = vmatpush1.msra.mxu0 0.0
        %1366 = vmatprep.subr.mxu0 0.0
        %1367 = vmatpush1.msra.mxu0 0.0
        %1368 = vmatprep.subr.mxu0 0.0
        %1369 = vmatpush1.msra.mxu0 0.0
        %1370 = vmatprep.subr.mxu0 0.0
        %1371 = vmatpush1.msra.mxu0 0.0
        %1372 = vmatprep.subr.mxu0 0.0
        %1373 = vmatpush1.msra.mxu0 0.0
        %1374 = vmatprep.subr.mxu0 0.0
        %1375 = vmatpush1.msra.mxu0 0.0
        %1376 = vmatprep.subr.mxu0 0.0
        %1377 = vmatpush1.msra.mxu0 0.0
        %1378 = vmatprep.subr.mxu0 0.0
        %1379 = vmatpush1.msra.mxu0 0.0
        %1380 = vmatprep.subr.mxu0 0.0
        %1381 = vmatpush1.msra.mxu0 0.0
        %1382 = vmatprep.subr.mxu0 0.0
        %1383 = vmatpush1.msra.mxu0 0.0
        %1384 = vmatprep.subr.mxu0 0.0
        %1385 = vmatpush1.msra.mxu0 0.0
        %1386 = vmatprep.subr.mxu0 0.0
        %1387 = vmatpush1.msra.mxu0 0.0
        %1388 = vmatprep.subr.mxu0 0.0
        %1389 = vmatpush1.msra.mxu0 0.0
        %1390 = vmatprep.subr.mxu0 0.0
        %1391 = vmatpush1.msra.mxu0 0.0
        %1392 = vmatprep.mubr.f32.mxu0 0.0
        %1393 = vmatmul.mubr.f32.gmra.mrb[0].mxu0 %v1323
        %v1394 = vpop.f32.mrb[0].mxu0
        %v1395 = vadd.f32 0.0, %v1394
        %v1396 = vpop.f32.mrb[0].mxu0
        %1397 = vdwg.mxu0
        %v1398 = vadd.f32 %v1152, %v1395
        %s1399 = scalar_lea.vmem %s1, 32
        %v1400 = vld [vmem:[%s1399] sm:$0xff]
        %1401 = vrot.lane.b32.xlu0 %v414, 112
        %v1402 = vpop.permute.xlu0 %1401
        %v1404 = vsel %vm418, %v1400, 0
        %v1406 = vsel %vm418, %v1402, 0
        %1408 = vmatprep.subr.mxu0 0.0
        %1409 = vmatpush1.xpose.msra.mxu0 %v1406
        %1410 = vmatprep.subr.mxu0 0.0
        %1411 = vmatpush1.xpose.msra.mxu0 0.0
        %1412 = vmatprep.subr.mxu0 0.0
        %1413 = vmatpush1.xpose.msra.mxu0 0.0
        %1414 = vmatprep.subr.mxu0 0.0
        %1415 = vmatpush1.xpose.msra.mxu0 0.0
        %1416 = vmatprep.subr.mxu0 0.0
        %1417 = vmatpush1.xpose.msra.mxu0 0.0
        %1418 = vmatprep.subr.mxu0 0.0
        %1419 = vmatpush1.xpose.msra.mxu0 0.0
        %1420 = vmatprep.subr.mxu0 0.0
        %1421 = vmatpush1.xpose.msra.mxu0 0.0
        %1422 = vmatprep.subr.mxu0 0.0
        %1423 = vmatpush1.xpose.msra.mxu0 0.0
        %1424 = vmatprep.subr.mxu0 0.0
        %1425 = vmatpush1.xpose.msra.mxu0 0.0
        %1426 = vmatprep.subr.mxu0 0.0
        %1427 = vmatpush1.xpose.msra.mxu0 0.0
        %1428 = vmatprep.subr.mxu0 0.0
        %1429 = vmatpush1.xpose.msra.mxu0 0.0
        %1430 = vmatprep.subr.mxu0 0.0
        %1431 = vmatpush1.xpose.msra.mxu0 0.0
        %1432 = vmatprep.subr.mxu0 0.0
        %1433 = vmatpush1.xpose.msra.mxu0 0.0
        %1434 = vmatprep.subr.mxu0 0.0
        %1435 = vmatpush1.xpose.msra.mxu0 0.0
        %1436 = vmatprep.subr.mxu0 0.0
        %1437 = vmatpush1.xpose.msra.mxu0 0.0
        %1438 = vmatprep.subr.mxu0 0.0
        %1439 = vmatpush1.xpose.msra.mxu0 0.0
        %1440 = vmatprep.subr.mxu0 0.0
        %1441 = vmatpush1.xpose.msra.mxu0 0.0
        %1442 = vmatprep.subr.mxu0 0.0
        %1443 = vmatpush1.xpose.msra.mxu0 0.0
        %1444 = vmatprep.subr.mxu0 0.0
        %1445 = vmatpush1.xpose.msra.mxu0 0.0
        %1446 = vmatprep.subr.mxu0 0.0
        %1447 = vmatpush1.xpose.msra.mxu0 0.0
        %1448 = vmatprep.subr.mxu0 0.0
        %1449 = vmatpush1.xpose.msra.mxu0 0.0
        %1450 = vmatprep.subr.mxu0 0.0
        %1451 = vmatpush1.xpose.msra.mxu0 0.0
        %1452 = vmatprep.subr.mxu0 0.0
        %1453 = vmatpush1.xpose.msra.mxu0 0.0
        %1454 = vmatprep.subr.mxu0 0.0
        %1455 = vmatpush1.xpose.msra.mxu0 0.0
        %1456 = vmatprep.subr.mxu0 0.0
        %1457 = vmatpush1.xpose.msra.mxu0 0.0
        %1458 = vmatprep.subr.mxu0 0.0
        %1459 = vmatpush1.xpose.msra.mxu0 0.0
        %1460 = vmatprep.subr.mxu0 0.0
        %1461 = vmatpush1.xpose.msra.mxu0 0.0
        %1462 = vmatprep.subr.mxu0 0.0
        %1463 = vmatpush1.xpose.msra.mxu0 0.0
        %1464 = vmatprep.subr.mxu0 0.0
        %1465 = vmatpush1.xpose.msra.mxu0 0.0
        %1466 = vmatprep.subr.mxu0 0.0
        %1467 = vmatpush1.xpose.msra.mxu0 0.0
        %1468 = vmatprep.subr.mxu0 0.0
        %1469 = vmatpush1.xpose.msra.mxu0 0.0
        %1470 = vmatprep.subr.mxu0 0.0
        %1471 = vmatpush1.xpose.msra.mxu0 0.0
        %1472 = vmatprep.mubr.f32.mxu0 0.0
        %1473 = vmatmul.mubr.f32.gmra.mrb[0].mxu0 %v1404
        %v1474 = vpop.f32.mrb[0].mxu0
        %v1475 = vadd.f32 0.0, %v1474
        %v1476 = vpop.f32.mrb[0].mxu0
        %1477 = vdwg.mxu0
        %v1478 = vmul.f32 %v1475, 0.5
        %v1479 = vsel %vm496, %v1478, -inf
        %1480 = vmax.xlane.f32.xlu0 %v1479
        %v1481 = vpop.xlane.xlu0 %1480
        %v1482 = vsub.f32 %v1478, %v1481
        %v1483 = vmul.f32 %v1482, 1.442695
        %v1484 = vpow.pop %v1483
        %v1485 = vsel %vm496, %v1484, 0.0
        %1486 = vadd.xlane.f32.xlu0 %v1485
        %v1487 = vpop.xlane.xlu0 %1486
        %v1488 = vrcp.pop %v1487
        %v1489 = vmul.f32 %v1484, %v1488
        %1490 = vrot.lane.b32.xlu0 %v414, 80
        %v1491 = vpop.permute.xlu0 %1490
        %v1494 = vsel %vm496, %v1489, 0
        %1496 = vmatprep.subr.mxu0 0.0
        %1497 = vmatpush1.msra.mxu0 %v1491
        %1498 = vmatprep.subr.mxu0 0.0
        %1499 = vmatpush1.msra.mxu0 0.0
        %1500 = vmatprep.subr.mxu0 0.0
        %1501 = vmatpush1.msra.mxu0 0.0
        %1502 = vmatprep.subr.mxu0 0.0
        %1503 = vmatpush1.msra.mxu0 0.0
        %1504 = vmatprep.subr.mxu0 0.0
        %1505 = vmatpush1.msra.mxu0 0.0
        %1506 = vmatprep.subr.mxu0 0.0
        %1507 = vmatpush1.msra.mxu0 0.0
        %1508 = vmatprep.subr.mxu0 0.0
        %1509 = vmatpush1.msra.mxu0 0.0
        %1510 = vmatprep.subr.mxu0 0.0
        %1511 = vmatpush1.msra.mxu0 0.0
        %1512 = vmatprep.subr.mxu0 0.0
        %1513 = vmatpush1.msra.mxu0 0.0
        %1514 = vmatprep.subr.mxu0 0.0
        %1515 = vmatpush1.msra.mxu0 0.0
        %1516 = vmatprep.subr.mxu0 0.0
        %1517 = vmatpush1.msra.mxu0 0.0
        %1518 = vmatprep.subr.mxu0 0.0
        %1519 = vmatpush1.msra.mxu0 0.0
        %1520 = vmatprep.subr.mxu0 0.0
        %1521 = vmatpush1.msra.mxu0 0.0
        %1522 = vmatprep.subr.mxu0 0.0
        %1523 = vmatpush1.msra.mxu0 0.0
        %1524 = vmatprep.subr.mxu0 0.0
        %1525 = vmatpush1.msra.mxu0 0.0
        %1526 = vmatprep.subr.mxu0 0.0
        %1527 = vmatpush1.msra.mxu0 0.0
        %1528 = vmatprep.subr.mxu0 0.0
        %1529 = vmatpush1.msra.mxu0 0.0
        %1530 = vmatprep.subr.mxu0 0.0
        %1531 = vmatpush1.msra.mxu0 0.0
        %1532 = vmatprep.subr.mxu0 0.0
        %1533 = vmatpush1.msra.mxu0 0.0
        %1534 = vmatprep.subr.mxu0 0.0
        %1535 = vmatpush1.msra.mxu0 0.0
        %1536 = vmatprep.subr.mxu0 0.0
        %1537 = vmatpush1.msra.mxu0 0.0
        %1538 = vmatprep.subr.mxu0 0.0
        %1539 = vmatpush1.msra.mxu0 0.0
        %1540 = vmatprep.subr.mxu0 0.0
        %1541 = vmatpush1.msra.mxu0 0.0
        %1542 = vmatprep.subr.mxu0 0.0
        %1543 = vmatpush1.msra.mxu0 0.0
        %1544 = vmatprep.subr.mxu0 0.0
        %1545 = vmatpush1.msra.mxu0 0.0
        %1546 = vmatprep.subr.mxu0 0.0
        %1547 = vmatpush1.msra.mxu0 0.0
        %1548 = vmatprep.subr.mxu0 0.0
        %1549 = vmatpush1.msra.mxu0 0.0
        %1550 = vmatprep.subr.mxu0 0.0
        %1551 = vmatpush1.msra.mxu0 0.0
        %1552 = vmatprep.subr.mxu0 0.0
        %1553 = vmatpush1.msra.mxu0 0.0
        %1554 = vmatprep.subr.mxu0 0.0
        %1555 = vmatpush1.msra.mxu0 0.0
        %1556 = vmatprep.subr.mxu0 0.0
        %1557 = vmatpush1.msra.mxu0 0.0
        %1558 = vmatprep.subr.mxu0 0.0
        %1559 = vmatpush1.msra.mxu0 0.0
        %1560 = vmatprep.mubr.f32.mxu0 0.0
        %1561 = vmatmul.mubr.f32.gmra.mrb[0].mxu0 %v1494
        %v1562 = vpop.f32.mrb[0].mxu0
        %v1563 = vadd.f32 0.0, %v1562
        %v1564 = vpop.f32.mrb[0].mxu0
        %1565 = vdwg.mxu0
        %s1566 = scalar_lea.vmem %s6, 16
        %v1567 = vld [vmem:[%s1566] sm:$0xf]
        %v1569 = vsel %vm418, %v1563, 0
        %v1572 = vsel %vm757, %v1567, 0
        %1574 = vmatprep.subr.mxu0 0.0
        %1575 = vmatpush1.msra.mxu0 %v1572
        %1576 = vmatprep.subr.mxu0 0.0
        %1577 = vmatpush1.msra.mxu0 0.0
        %1578 = vmatprep.subr.mxu0 0.0
        %1579 = vmatpush1.msra.mxu0 0.0
        %1580 = vmatprep.subr.mxu0 0.0
        %1581 = vmatpush1.msra.mxu0 0.0
        %1582 = vmatprep.subr.mxu0 0.0
        %1583 = vmatpush1.msra.mxu0 0.0
        %1584 = vmatprep.subr.mxu0 0.0
        %1585 = vmatpush1.msra.mxu0 0.0
        %1586 = vmatprep.subr.mxu0 0.0
        %1587 = vmatpush1.msra.mxu0 0.0
        %1588 = vmatprep.subr.mxu0 0.0
        %1589 = vmatpush1.msra.mxu0 0.0
        %1590 = vmatprep.subr.mxu0 0.0
        %1591 = vmatpush1.msra.mxu0 0.0
        %1592 = vmatprep.subr.mxu0 0.0
        %1593 = vmatpush1.msra.mxu0 0.0
        %1594 = vmatprep.subr.mxu0 0.0
        %1595 = vmatpush1.msra.mxu0 0.0
        %1596 = vmatprep.subr.mxu0 0.0
        %1597 = vmatpush1.msra.mxu0 0.0
        %1598 = vmatprep.subr.mxu0 0.0
        %1599 = vmatpush1.msra.mxu0 0.0
        %1600 = vmatprep.subr.mxu0 0.0
        %1601 = vmatpush1.msra.mxu0 0.0
        %1602 = vmatprep.subr.mxu0 0.0
        %1603 = vmatpush1.msra.mxu0 0.0
        %1604 = vmatprep.subr.mxu0 0.0
        %1605 = vmatpush1.msra.mxu0 0.0
        %1606 = vmatprep.subr.mxu0 0.0
        %1607 = vmatpush1.msra.mxu0 0.0
        %1608 = vmatprep.subr.mxu0 0.0
        %1609 = vmatpush1.msra.mxu0 0.0
        %1610 = vmatprep.subr.mxu0 0.0
        %1611 = vmatpush1.msra.mxu0 0.0
        %1612 = vmatprep.subr.mxu0 0.0
        %1613 = vmatpush1.msra.mxu0 0.0
        %1614 = vmatprep.subr.mxu0 0.0
        %1615 = vmatpush1.msra.mxu0 0.0
        %1616 = vmatprep.subr.mxu0 0.0
        %1617 = vmatpush1.msra.mxu0 0.0
        %1618 = vmatprep.subr.mxu0 0.0
        %1619 = vmatpush1.msra.mxu0 0.0
        %1620 = vmatprep.subr.mxu0 0.0
        %1621 = vmatpush1.msra.mxu0 0.0
        %1622 = vmatprep.subr.mxu0 0.0
        %1623 = vmatpush1.msra.mxu0 0.0
        %1624 = vmatprep.subr.mxu0 0.0
        %1625 = vmatpush1.msra.mxu0 0.0
        %1626 = vmatprep.subr.mxu0 0.0
        %1627 = vmatpush1.msra.mxu0 0.0
        %1628 = vmatprep.subr.mxu0 0.0
        %1629 = vmatpush1.msra.mxu0 0.0
        %1630 = vmatprep.subr.mxu0 0.0
        %1631 = vmatpush1.msra.mxu0 0.0
        %1632 = vmatprep.subr.mxu0 0.0
        %1633 = vmatpush1.msra.mxu0 0.0
        %1634 = vmatprep.subr.mxu0 0.0
        %1635 = vmatpush1.msra.mxu0 0.0
        %1636 = vmatprep.subr.mxu0 0.0
        %1637 = vmatpush1.msra.mxu0 0.0
        %1638 = vmatprep.mubr.f32.mxu0 0.0
        %1639 = vmatmul.mubr.f32.gmra.mrb[0].mxu0 %v1569
        %v1640 = vpop.f32.mrb[0].mxu0
        %v1641 = vadd.f32 0.0, %v1640
        %v1642 = vpop.f32.mrb[0].mxu0
        %1643 = vdwg.mxu0
        %v1644 = vadd.f32 %v1398, %v1641
        %s1645 = scalar_lea.vmem %s1, 40
        %v1646 = vld [vmem:[%s1645] sm:$0xff]
        %1647 = vrot.lane.b32.xlu0 %v414, 108
        %v1648 = vpop.permute.xlu0 %1647
        %v1650 = vsel %vm418, %v1646, 0
        %v1652 = vsel %vm418, %v1648, 0
        %1654 = vmatprep.subr.mxu0 0.0
        %1655 = vmatpush1.xpose.msra.mxu0 %v1652
        %1656 = vmatprep.subr.mxu0 0.0
        %1657 = vmatpush1.xpose.msra.mxu0 0.0
        %1658 = vmatprep.subr.mxu0 0.0
        %1659 = vmatpush1.xpose.msra.mxu0 0.0
        %1660 = vmatprep.subr.mxu0 0.0
        %1661 = vmatpush1.xpose.msra.mxu0 0.0
        %1662 = vmatprep.subr.mxu0 0.0
        %1663 = vmatpush1.xpose.msra.mxu0 0.0
        %1664 = vmatprep.subr.mxu0 0.0
        %1665 = vmatpush1.xpose.msra.mxu0 0.0
        %1666 = vmatprep.subr.mxu0 0.0
        %1667 = vmatpush1.xpose.msra.mxu0 0.0
        %1668 = vmatprep.subr.mxu0 0.0
        %1669 = vmatpush1.xpose.msra.mxu0 0.0
        %1670 = vmatprep.subr.mxu0 0.0
        %1671 = vmatpush1.xpose.msra.mxu0 0.0
        %1672 = vmatprep.subr.mxu0 0.0
        %1673 = vmatpush1.xpose.msra.mxu0 0.0
        %1674 = vmatprep.subr.mxu0 0.0
        %1675 = vmatpush1.xpose.msra.mxu0 0.0
        %1676 = vmatprep.subr.mxu0 0.0
        %1677 = vmatpush1.xpose.msra.mxu0 0.0
        %1678 = vmatprep.subr.mxu0 0.0
        %1679 = vmatpush1.xpose.msra.mxu0 0.0
        %1680 = vmatprep.subr.mxu0 0.0
        %1681 = vmatpush1.xpose.msra.mxu0 0.0
        %1682 = vmatprep.subr.mxu0 0.0
        %1683 = vmatpush1.xpose.msra.mxu0 0.0
        %1684 = vmatprep.subr.mxu0 0.0
        %1685 = vmatpush1.xpose.msra.mxu0 0.0
        %1686 = vmatprep.subr.mxu0 0.0
        %1687 = vmatpush1.xpose.msra.mxu0 0.0
        %1688 = vmatprep.subr.mxu0 0.0
        %1689 = vmatpush1.xpose.msra.mxu0 0.0
        %1690 = vmatprep.subr.mxu0 0.0
        %1691 = vmatpush1.xpose.msra.mxu0 0.0
        %1692 = vmatprep.subr.mxu0 0.0
        %1693 = vmatpush1.xpose.msra.mxu0 0.0
        %1694 = vmatprep.subr.mxu0 0.0
        %1695 = vmatpush1.xpose.msra.mxu0 0.0
        %1696 = vmatprep.subr.mxu0 0.0
        %1697 = vmatpush1.xpose.msra.mxu0 0.0
        %1698 = vmatprep.subr.mxu0 0.0
        %1699 = vmatpush1.xpose.msra.mxu0 0.0
        %1700 = vmatprep.subr.mxu0 0.0
        %1701 = vmatpush1.xpose.msra.mxu0 0.0
        %1702 = vmatprep.subr.mxu0 0.0
        %1703 = vmatpush1.xpose.msra.mxu0 0.0
        %1704 = vmatprep.subr.mxu0 0.0
        %1705 = vmatpush1.xpose.msra.mxu0 0.0
        %1706 = vmatprep.subr.mxu0 0.0
        %1707 = vmatpush1.xpose.msra.mxu0 0.0
        %1708 = vmatprep.subr.mxu0 0.0
        %1709 = vmatpush1.xpose.msra.mxu0 0.0
        %1710 = vmatprep.subr.mxu0 0.0
        %1711 = vmatpush1.xpose.msra.mxu0 0.0
        %1712 = vmatprep.subr.mxu0 0.0
        %1713 = vmatpush1.xpose.msra.mxu0 0.0
        %1714 = vmatprep.subr.mxu0 0.0
        %1715 = vmatpush1.xpose.msra.mxu0 0.0
        %1716 = vmatprep.subr.mxu0 0.0
        %1717 = vmatpush1.xpose.msra.mxu0 0.0
        %1718 = vmatprep.mubr.f32.mxu0 0.0
        %1719 = vmatmul.mubr.f32.gmra.mrb[0].mxu0 %v1650
        %v1720 = vpop.f32.mrb[0].mxu0
        %v1721 = vadd.f32 0.0, %v1720
        %v1722 = vpop.f32.mrb[0].mxu0
        %1723 = vdwg.mxu0
        %v1724 = vmul.f32 %v1721, 0.5
        %v1725 = vsel %vm496, %v1724, -inf
        %1726 = vmax.xlane.f32.xlu0 %v1725
        %v1727 = vpop.xlane.xlu0 %1726
        %v1728 = vsub.f32 %v1724, %v1727
        %v1729 = vmul.f32 %v1728, 1.442695
        %v1730 = vpow.pop %v1729
        %v1731 = vsel %vm496, %v1730, 0.0
        %1732 = vadd.xlane.f32.xlu0 %v1731
        %v1733 = vpop.xlane.xlu0 %1732
        %v1734 = vrcp.pop %v1733
        %v1735 = vmul.f32 %v1730, %v1734
        %1736 = vrot.lane.b32.xlu0 %v414, 76
        %v1737 = vpop.permute.xlu0 %1736
        %v1740 = vsel %vm496, %v1735, 0
        %1742 = vmatprep.subr.mxu0 0.0
        %1743 = vmatpush1.msra.mxu0 %v1737
        %1744 = vmatprep.subr.mxu0 0.0
        %1745 = vmatpush1.msra.mxu0 0.0
        %1746 = vmatprep.subr.mxu0 0.0
        %1747 = vmatpush1.msra.mxu0 0.0
        %1748 = vmatprep.subr.mxu0 0.0
        %1749 = vmatpush1.msra.mxu0 0.0
        %1750 = vmatprep.subr.mxu0 0.0
        %1751 = vmatpush1.msra.mxu0 0.0
        %1752 = vmatprep.subr.mxu0 0.0
        %1753 = vmatpush1.msra.mxu0 0.0
        %1754 = vmatprep.subr.mxu0 0.0
        %1755 = vmatpush1.msra.mxu0 0.0
        %1756 = vmatprep.subr.mxu0 0.0
        %1757 = vmatpush1.msra.mxu0 0.0
        %1758 = vmatprep.subr.mxu0 0.0
        %1759 = vmatpush1.msra.mxu0 0.0
        %1760 = vmatprep.subr.mxu0 0.0
        %1761 = vmatpush1.msra.mxu0 0.0
        %1762 = vmatprep.subr.mxu0 0.0
        %1763 = vmatpush1.msra.mxu0 0.0
        %1764 = vmatprep.subr.mxu0 0.0
        %1765 = vmatpush1.msra.mxu0 0.0
        %1766 = vmatprep.subr.mxu0 0.0
        %1767 = vmatpush1.msra.mxu0 0.0
        %1768 = vmatprep.subr.mxu0 0.0
        %1769 = vmatpush1.msra.mxu0 0.0
        %1770 = vmatprep.subr.mxu0 0.0
        %1771 = vmatpush1.msra.mxu0 0.0
        %1772 = vmatprep.subr.mxu0 0.0
        %1773 = vmatpush1.msra.mxu0 0.0
        %1774 = vmatprep.subr.mxu0 0.0
        %1775 = vmatpush1.msra.mxu0 0.0
        %1776 = vmatprep.subr.mxu0 0.0
        %1777 = vmatpush1.msra.mxu0 0.0
        %1778 = vmatprep.subr.mxu0 0.0
        %1779 = vmatpush1.msra.mxu0 0.0
        %1780 = vmatprep.subr.mxu0 0.0
        %1781 = vmatpush1.msra.mxu0 0.0
        %1782 = vmatprep.subr.mxu0 0.0
        %1783 = vmatpush1.msra.mxu0 0.0
        %1784 = vmatprep.subr.mxu0 0.0
        %1785 = vmatpush1.msra.mxu0 0.0
        %1786 = vmatprep.subr.mxu0 0.0
        %1787 = vmatpush1.msra.mxu0 0.0
        %1788 = vmatprep.subr.mxu0 0.0
        %1789 = vmatpush1.msra.mxu0 0.0
        %1790 = vmatprep.subr.mxu0 0.0
        %1791 = vmatpush1.msra.mxu0 0.0
        %1792 = vmatprep.subr.mxu0 0.0
        %1793 = vmatpush1.msra.mxu0 0.0
        %1794 = vmatprep.subr.mxu0 0.0
        %1795 = vmatpush1.msra.mxu0 0.0
        %1796 = vmatprep.subr.mxu0 0.0
        %1797 = vmatpush1.msra.mxu0 0.0
        %1798 = vmatprep.subr.mxu0 0.0
        %1799 = vmatpush1.msra.mxu0 0.0
        %1800 = vmatprep.subr.mxu0 0.0
        %1801 = vmatpush1.msra.mxu0 0.0
        %1802 = vmatprep.subr.mxu0 0.0
        %1803 = vmatpush1.msra.mxu0 0.0
        %1804 = vmatprep.subr.mxu0 0.0
        %1805 = vmatpush1.msra.mxu0 0.0
        %1806 = vmatprep.mubr.f32.mxu0 0.0
        %1807 = vmatmul.mubr.f32.gmra.mrb[0].mxu0 %v1740
        %v1808 = vpop.f32.mrb[0].mxu0
        %v1809 = vadd.f32 0.0, %v1808
        %v1810 = vpop.f32.mrb[0].mxu0
        %1811 = vdwg.mxu0
        %s1812 = scalar_lea.vmem %s6, 20
        %v1813 = vld [vmem:[%s1812] sm:$0xf]
        %v1815 = vsel %vm418, %v1809, 0
        %v1818 = vsel %vm757, %v1813, 0
        %1820 = vmatprep.subr.mxu0 0.0
        %1821 = vmatpush1.msra.mxu0 %v1818
        %1822 = vmatprep.subr.mxu0 0.0
        %1823 = vmatpush1.msra.mxu0 0.0
        %1824 = vmatprep.subr.mxu0 0.0
        %1825 = vmatpush1.msra.mxu0 0.0
        %1826 = vmatprep.subr.mxu0 0.0
        %1827 = vmatpush1.msra.mxu0 0.0
        %1828 = vmatprep.subr.mxu0 0.0
        %1829 = vmatpush1.msra.mxu0 0.0
        %1830 = vmatprep.subr.mxu0 0.0
        %1831 = vmatpush1.msra.mxu0 0.0
        %1832 = vmatprep.subr.mxu0 0.0
        %1833 = vmatpush1.msra.mxu0 0.0
        %1834 = vmatprep.subr.mxu0 0.0
        %1835 = vmatpush1.msra.mxu0 0.0
        %1836 = vmatprep.subr.mxu0 0.0
        %1837 = vmatpush1.msra.mxu0 0.0
        %1838 = vmatprep.subr.mxu0 0.0
        %1839 = vmatpush1.msra.mxu0 0.0
        %1840 = vmatprep.subr.mxu0 0.0
        %1841 = vmatpush1.msra.mxu0 0.0
        %1842 = vmatprep.subr.mxu0 0.0
        %1843 = vmatpush1.msra.mxu0 0.0
        %1844 = vmatprep.subr.mxu0 0.0
        %1845 = vmatpush1.msra.mxu0 0.0
        %1846 = vmatprep.subr.mxu0 0.0
        %1847 = vmatpush1.msra.mxu0 0.0
        %1848 = vmatprep.subr.mxu0 0.0
        %1849 = vmatpush1.msra.mxu0 0.0
        %1850 = vmatprep.subr.mxu0 0.0
        %1851 = vmatpush1.msra.mxu0 0.0
        %1852 = vmatprep.subr.mxu0 0.0
        %1853 = vmatpush1.msra.mxu0 0.0
        %1854 = vmatprep.subr.mxu0 0.0
        %1855 = vmatpush1.msra.mxu0 0.0
        %1856 = vmatprep.subr.mxu0 0.0
        %1857 = vmatpush1.msra.mxu0 0.0
        %1858 = vmatprep.subr.mxu0 0.0
        %1859 = vmatpush1.msra.mxu0 0.0
        %1860 = vmatprep.subr.mxu0 0.0
        %1861 = vmatpush1.msra.mxu0 0.0
        %1862 = vmatprep.subr.mxu0 0.0
        %1863 = vmatpush1.msra.mxu0 0.0
        %1864 = vmatprep.subr.mxu0 0.0
        %1865 = vmatpush1.msra.mxu0 0.0
        %1866 = vmatprep.subr.mxu0 0.0
        %1867 = vmatpush1.msra.mxu0 0.0
        %1868 = vmatprep.subr.mxu0 0.0
        %1869 = vmatpush1.msra.mxu0 0.0
        %1870 = vmatprep.subr.mxu0 0.0
        %1871 = vmatpush1.msra.mxu0 0.0
        %1872 = vmatprep.subr.mxu0 0.0
        %1873 = vmatpush1.msra.mxu0 0.0
        %1874 = vmatprep.subr.mxu0 0.0
        %1875 = vmatpush1.msra.mxu0 0.0
        %1876 = vmatprep.subr.mxu0 0.0
        %1877 = vmatpush1.msra.mxu0 0.0
        %1878 = vmatprep.subr.mxu0 0.0
        %1879 = vmatpush1.msra.mxu0 0.0
        %1880 = vmatprep.subr.mxu0 0.0
        %1881 = vmatpush1.msra.mxu0 0.0
        %1882 = vmatprep.subr.mxu0 0.0
        %1883 = vmatpush1.msra.mxu0 0.0
        %1884 = vmatprep.mubr.f32.mxu0 0.0
        %1885 = vmatmul.mubr.f32.gmra.mrb[0].mxu0 %v1815
        %v1886 = vpop.f32.mrb[0].mxu0
        %v1887 = vadd.f32 0.0, %v1886
        %v1888 = vpop.f32.mrb[0].mxu0
        %1889 = vdwg.mxu0
        %v1890 = vadd.f32 %v1644, %v1887
        %s1891 = scalar_lea.vmem %s1, 48
        %v1892 = vld [vmem:[%s1891] sm:$0xff]
        %1893 = vrot.lane.b32.xlu0 %v414, 104
        %v1894 = vpop.permute.xlu0 %1893
        %v1896 = vsel %vm418, %v1892, 0
        %v1898 = vsel %vm418, %v1894, 0
        %1900 = vmatprep.subr.mxu0 0.0
        %1901 = vmatpush1.xpose.msra.mxu0 %v1898
        %1902 = vmatprep.subr.mxu0 0.0
        %1903 = vmatpush1.xpose.msra.mxu0 0.0
        %1904 = vmatprep.subr.mxu0 0.0
        %1905 = vmatpush1.xpose.msra.mxu0 0.0
        %1906 = vmatprep.subr.mxu0 0.0
        %1907 = vmatpush1.xpose.msra.mxu0 0.0
        %1908 = vmatprep.subr.mxu0 0.0
        %1909 = vmatpush1.xpose.msra.mxu0 0.0
        %1910 = vmatprep.subr.mxu0 0.0
        %1911 = vmatpush1.xpose.msra.mxu0 0.0
        %1912 = vmatprep.subr.mxu0 0.0
        %1913 = vmatpush1.xpose.msra.mxu0 0.0
        %1914 = vmatprep.subr.mxu0 0.0
        %1915 = vmatpush1.xpose.msra.mxu0 0.0
        %1916 = vmatprep.subr.mxu0 0.0
        %1917 = vmatpush1.xpose.msra.mxu0 0.0
        %1918 = vmatprep.subr.mxu0 0.0
        %1919 = vmatpush1.xpose.msra.mxu0 0.0
        %1920 = vmatprep.subr.mxu0 0.0
        %1921 = vmatpush1.xpose.msra.mxu0 0.0
        %1922 = vmatprep.subr.mxu0 0.0
        %1923 = vmatpush1.xpose.msra.mxu0 0.0
        %1924 = vmatprep.subr.mxu0 0.0
        %1925 = vmatpush1.xpose.msra.mxu0 0.0
        %1926 = vmatprep.subr.mxu0 0.0
        %1927 = vmatpush1.xpose.msra.mxu0 0.0
        %1928 = vmatprep.subr.mxu0 0.0
        %1929 = vmatpush1.xpose.msra.mxu0 0.0
        %1930 = vmatprep.subr.mxu0 0.0
        %1931 = vmatpush1.xpose.msra.mxu0 0.0
        %1932 = vmatprep.subr.mxu0 0.0
        %1933 = vmatpush1.xpose.msra.mxu0 0.0
        %1934 = vmatprep.subr.mxu0 0.0
        %1935 = vmatpush1.xpose.msra.mxu0 0.0
        %1936 = vmatprep.subr.mxu0 0.0
        %1937 = vmatpush1.xpose.msra.mxu0 0.0
        %1938 = vmatprep.subr.mxu0 0.0
        %1939 = vmatpush1.xpose.msra.mxu0 0.0
        %1940 = vmatprep.subr.mxu0 0.0
        %1941 = vmatpush1.xpose.msra.mxu0 0.0
        %1942 = vmatprep.subr.mxu0 0.0
        %1943 = vmatpush1.xpose.msra.mxu0 0.0
        %1944 = vmatprep.subr.mxu0 0.0
        %1945 = vmatpush1.xpose.msra.mxu0 0.0
        %1946 = vmatprep.subr.mxu0 0.0
        %1947 = vmatpush1.xpose.msra.mxu0 0.0
        %1948 = vmatprep.subr.mxu0 0.0
        %1949 = vmatpush1.xpose.msra.mxu0 0.0
        %1950 = vmatprep.subr.mxu0 0.0
        %1951 = vmatpush1.xpose.msra.mxu0 0.0
        %1952 = vmatprep.subr.mxu0 0.0
        %1953 = vmatpush1.xpose.msra.mxu0 0.0
        %1954 = vmatprep.subr.mxu0 0.0
        %1955 = vmatpush1.xpose.msra.mxu0 0.0
        %1956 = vmatprep.subr.mxu0 0.0
        %1957 = vmatpush1.xpose.msra.mxu0 0.0
        %1958 = vmatprep.subr.mxu0 0.0
        %1959 = vmatpush1.xpose.msra.mxu0 0.0
        %1960 = vmatprep.subr.mxu0 0.0
        %1961 = vmatpush1.xpose.msra.mxu0 0.0
        %1962 = vmatprep.subr.mxu0 0.0
        %1963 = vmatpush1.xpose.msra.mxu0 0.0
        %1964 = vmatprep.mubr.f32.mxu0 0.0
        %1965 = vmatmul.mubr.f32.gmra.mrb[0].mxu0 %v1896
        %v1966 = vpop.f32.mrb[0].mxu0
        %v1967 = vadd.f32 0.0, %v1966
        %v1968 = vpop.f32.mrb[0].mxu0
        %1969 = vdwg.mxu0
        %v1970 = vmul.f32 %v1967, 0.5
        %v1971 = vsel %vm496, %v1970, -inf
        %1972 = vmax.xlane.f32.xlu0 %v1971
        %v1973 = vpop.xlane.xlu0 %1972
        %v1974 = vsub.f32 %v1970, %v1973
        %v1975 = vmul.f32 %v1974, 1.442695
        %v1976 = vpow.pop %v1975
        %v1977 = vsel %vm496, %v1976, 0.0
        %1978 = vadd.xlane.f32.xlu0 %v1977
        %v1979 = vpop.xlane.xlu0 %1978
        %v1980 = vrcp.pop %v1979
        %v1981 = vmul.f32 %v1976, %v1980
        %1982 = vrot.lane.b32.xlu0 %v414, 72
        %v1983 = vpop.permute.xlu0 %1982
        %v1986 = vsel %vm496, %v1981, 0
        %1988 = vmatprep.subr.mxu0 0.0
        %1989 = vmatpush1.msra.mxu0 %v1983
        %1990 = vmatprep.subr.mxu0 0.0
        %1991 = vmatpush1.msra.mxu0 0.0
        %1992 = vmatprep.subr.mxu0 0.0
        %1993 = vmatpush1.msra.mxu0 0.0
        %1994 = vmatprep.subr.mxu0 0.0
        %1995 = vmatpush1.msra.mxu0 0.0
        %1996 = vmatprep.subr.mxu0 0.0
        %1997 = vmatpush1.msra.mxu0 0.0
        %1998 = vmatprep.subr.mxu0 0.0
        %1999 = vmatpush1.msra.mxu0 0.0
        %2000 = vmatprep.subr.mxu0 0.0
        %2001 = vmatpush1.msra.mxu0 0.0
        %2002 = vmatprep.subr.mxu0 0.0
        %2003 = vmatpush1.msra.mxu0 0.0
        %2004 = vmatprep.subr.mxu0 0.0
        %2005 = vmatpush1.msra.mxu0 0.0
        %2006 = vmatprep.subr.mxu0 0.0
        %2007 = vmatpush1.msra.mxu0 0.0
        %2008 = vmatprep.subr.mxu0 0.0
        %2009 = vmatpush1.msra.mxu0 0.0
        %2010 = vmatprep.subr.mxu0 0.0
        %2011 = vmatpush1.msra.mxu0 0.0
        %2012 = vmatprep.subr.mxu0 0.0
        %2013 = vmatpush1.msra.mxu0 0.0
        %2014 = vmatprep.subr.mxu0 0.0
        %2015 = vmatpush1.msra.mxu0 0.0
        %2016 = vmatprep.subr.mxu0 0.0
        %2017 = vmatpush1.msra.mxu0 0.0
        %2018 = vmatprep.subr.mxu0 0.0
        %2019 = vmatpush1.msra.mxu0 0.0
        %2020 = vmatprep.subr.mxu0 0.0
        %2021 = vmatpush1.msra.mxu0 0.0
        %2022 = vmatprep.subr.mxu0 0.0
        %2023 = vmatpush1.msra.mxu0 0.0
        %2024 = vmatprep.subr.mxu0 0.0
        %2025 = vmatpush1.msra.mxu0 0.0
        %2026 = vmatprep.subr.mxu0 0.0
        %2027 = vmatpush1.msra.mxu0 0.0
        %2028 = vmatprep.subr.mxu0 0.0
        %2029 = vmatpush1.msra.mxu0 0.0
        %2030 = vmatprep.subr.mxu0 0.0
        %2031 = vmatpush1.msra.mxu0 0.0
        %2032 = vmatprep.subr.mxu0 0.0
        %2033 = vmatpush1.msra.mxu0 0.0
        %2034 = vmatprep.subr.mxu0 0.0
        %2035 = vmatpush1.msra.mxu0 0.0
        %2036 = vmatprep.subr.mxu0 0.0
        %2037 = vmatpush1.msra.mxu0 0.0
        %2038 = vmatprep.subr.mxu0 0.0
        %2039 = vmatpush1.msra.mxu0 0.0
        %2040 = vmatprep.subr.mxu0 0.0
        %2041 = vmatpush1.msra.mxu0 0.0
        %2042 = vmatprep.subr.mxu0 0.0
        %2043 = vmatpush1.msra.mxu0 0.0
        %2044 = vmatprep.subr.mxu0 0.0
        %2045 = vmatpush1.msra.mxu0 0.0
        %2046 = vmatprep.subr.mxu0 0.0
        %2047 = vmatpush1.msra.mxu0 0.0
        %2048 = vmatprep.subr.mxu0 0.0
        %2049 = vmatpush1.msra.mxu0 0.0
        %2050 = vmatprep.subr.mxu0 0.0
        %2051 = vmatpush1.msra.mxu0 0.0
        %2052 = vmatprep.mubr.f32.mxu0 0.0
        %2053 = vmatmul.mubr.f32.gmra.mrb[0].mxu0 %v1986
        %v2054 = vpop.f32.mrb[0].mxu0
        %v2055 = vadd.f32 0.0, %v2054
        %v2056 = vpop.f32.mrb[0].mxu0
        %2057 = vdwg.mxu0
        %s2058 = scalar_lea.vmem %s6, 24
        %v2059 = vld [vmem:[%s2058] sm:$0xf]
        %v2061 = vsel %vm418, %v2055, 0
        %v2064 = vsel %vm757, %v2059, 0
        %2066 = vmatprep.subr.mxu0 0.0
        %2067 = vmatpush1.msra.mxu0 %v2064
        %2068 = vmatprep.subr.mxu0 0.0
        %2069 = vmatpush1.msra.mxu0 0.0
        %2070 = vmatprep.subr.mxu0 0.0
        %2071 = vmatpush1.msra.mxu0 0.0
        %2072 = vmatprep.subr.mxu0 0.0
        %2073 = vmatpush1.msra.mxu0 0.0
        %2074 = vmatprep.subr.mxu0 0.0
        %2075 = vmatpush1.msra.mxu0 0.0
        %2076 = vmatprep.subr.mxu0 0.0
        %2077 = vmatpush1.msra.mxu0 0.0
        %2078 = vmatprep.subr.mxu0 0.0
        %2079 = vmatpush1.msra.mxu0 0.0
        %2080 = vmatprep.subr.mxu0 0.0
        %2081 = vmatpush1.msra.mxu0 0.0
        %2082 = vmatprep.subr.mxu0 0.0
        %2083 = vmatpush1.msra.mxu0 0.0
        %2084 = vmatprep.subr.mxu0 0.0
        %2085 = vmatpush1.msra.mxu0 0.0
        %2086 = vmatprep.subr.mxu0 0.0
        %2087 = vmatpush1.msra.mxu0 0.0
        %2088 = vmatprep.subr.mxu0 0.0
        %2089 = vmatpush1.msra.mxu0 0.0
        %2090 = vmatprep.subr.mxu0 0.0
        %2091 = vmatpush1.msra.mxu0 0.0
        %2092 = vmatprep.subr.mxu0 0.0
        %2093 = vmatpush1.msra.mxu0 0.0
        %2094 = vmatprep.subr.mxu0 0.0
        %2095 = vmatpush1.msra.mxu0 0.0
        %2096 = vmatprep.subr.mxu0 0.0
        %2097 = vmatpush1.msra.mxu0 0.0
        %2098 = vmatprep.subr.mxu0 0.0
        %2099 = vmatpush1.msra.mxu0 0.0
        %2100 = vmatprep.subr.mxu0 0.0
        %2101 = vmatpush1.msra.mxu0 0.0
        %2102 = vmatprep.subr.mxu0 0.0
        %2103 = vmatpush1.msra.mxu0 0.0
        %2104 = vmatprep.subr.mxu0 0.0
        %2105 = vmatpush1.msra.mxu0 0.0
        %2106 = vmatprep.subr.mxu0 0.0
        %2107 = vmatpush1.msra.mxu0 0.0
        %2108 = vmatprep.subr.mxu0 0.0
        %2109 = vmatpush1.msra.mxu0 0.0
        %2110 = vmatprep.subr.mxu0 0.0
        %2111 = vmatpush1.msra.mxu0 0.0
        %2112 = vmatprep.subr.mxu0 0.0
        %2113 = vmatpush1.msra.mxu0 0.0
        %2114 = vmatprep.subr.mxu0 0.0
        %2115 = vmatpush1.msra.mxu0 0.0
        %2116 = vmatprep.subr.mxu0 0.0
        %2117 = vmatpush1.msra.mxu0 0.0
        %2118 = vmatprep.subr.mxu0 0.0
        %2119 = vmatpush1.msra.mxu0 0.0
        %2120 = vmatprep.subr.mxu0 0.0
        %2121 = vmatpush1.msra.mxu0 0.0
        %2122 = vmatprep.subr.mxu0 0.0
        %2123 = vmatpush1.msra.mxu0 0.0
        %2124 = vmatprep.subr.mxu0 0.0
        %2125 = vmatpush1.msra.mxu0 0.0
        %2126 = vmatprep.subr.mxu0 0.0
        %2127 = vmatpush1.msra.mxu0 0.0
        %2128 = vmatprep.subr.mxu0 0.0
        %2129 = vmatpush1.msra.mxu0 0.0
        %2130 = vmatprep.mubr.f32.mxu0 0.0
        %2131 = vmatmul.mubr.f32.gmra.mrb[0].mxu0 %v2061
        %v2132 = vpop.f32.mrb[0].mxu0
        %v2133 = vadd.f32 0.0, %v2132
        %v2134 = vpop.f32.mrb[0].mxu0
        %2135 = vdwg.mxu0
        %v2136 = vadd.f32 %v1890, %v2133
        %s2137 = scalar_lea.vmem %s1, 56
        %v2138 = vld [vmem:[%s2137] sm:$0xff]
        %2139 = vrot.lane.b32.xlu0 %v414, 100
        %v2140 = vpop.permute.xlu0 %2139
        %v2142 = vsel %vm418, %v2138, 0
        %v2144 = vsel %vm418, %v2140, 0
        %2146 = vmatprep.subr.mxu0 0.0
        %2147 = vmatpush1.xpose.msra.mxu0 %v2144
        %2148 = vmatprep.subr.mxu0 0.0
        %2149 = vmatpush1.xpose.msra.mxu0 0.0
        %2150 = vmatprep.subr.mxu0 0.0
        %2151 = vmatpush1.xpose.msra.mxu0 0.0
        %2152 = vmatprep.subr.mxu0 0.0
        %2153 = vmatpush1.xpose.msra.mxu0 0.0
        %2154 = vmatprep.subr.mxu0 0.0
        %2155 = vmatpush1.xpose.msra.mxu0 0.0
        %2156 = vmatprep.subr.mxu0 0.0
        %2157 = vmatpush1.xpose.msra.mxu0 0.0
        %2158 = vmatprep.subr.mxu0 0.0
        %2159 = vmatpush1.xpose.msra.mxu0 0.0
        %2160 = vmatprep.subr.mxu0 0.0
        %2161 = vmatpush1.xpose.msra.mxu0 0.0
        %2162 = vmatprep.subr.mxu0 0.0
        %2163 = vmatpush1.xpose.msra.mxu0 0.0
        %2164 = vmatprep.subr.mxu0 0.0
        %2165 = vmatpush1.xpose.msra.mxu0 0.0
        %2166 = vmatprep.subr.mxu0 0.0
        %2167 = vmatpush1.xpose.msra.mxu0 0.0
        %2168 = vmatprep.subr.mxu0 0.0
        %2169 = vmatpush1.xpose.msra.mxu0 0.0
        %2170 = vmatprep.subr.mxu0 0.0
        %2171 = vmatpush1.xpose.msra.mxu0 0.0
        %2172 = vmatprep.subr.mxu0 0.0
        %2173 = vmatpush1.xpose.msra.mxu0 0.0
        %2174 = vmatprep.subr.mxu0 0.0
        %2175 = vmatpush1.xpose.msra.mxu0 0.0
        %2176 = vmatprep.subr.mxu0 0.0
        %2177 = vmatpush1.xpose.msra.mxu0 0.0
        %2178 = vmatprep.subr.mxu0 0.0
        %2179 = vmatpush1.xpose.msra.mxu0 0.0
        %2180 = vmatprep.subr.mxu0 0.0
        %2181 = vmatpush1.xpose.msra.mxu0 0.0
        %2182 = vmatprep.subr.mxu0 0.0
        %2183 = vmatpush1.xpose.msra.mxu0 0.0
        %2184 = vmatprep.subr.mxu0 0.0
        %2185 = vmatpush1.xpose.msra.mxu0 0.0
        %2186 = vmatprep.subr.mxu0 0.0
        %2187 = vmatpush1.xpose.msra.mxu0 0.0
        %2188 = vmatprep.subr.mxu0 0.0
        %2189 = vmatpush1.xpose.msra.mxu0 0.0
        %2190 = vmatprep.subr.mxu0 0.0
        %2191 = vmatpush1.xpose.msra.mxu0 0.0
        %2192 = vmatprep.subr.mxu0 0.0
        %2193 = vmatpush1.xpose.msra.mxu0 0.0
        %2194 = vmatprep.subr.mxu0 0.0
        %2195 = vmatpush1.xpose.msra.mxu0 0.0
        %2196 = vmatprep.subr.mxu0 0.0
        %2197 = vmatpush1.xpose.msra.mxu0 0.0
        %2198 = vmatprep.subr.mxu0 0.0
        %2199 = vmatpush1.xpose.msra.mxu0 0.0
        %2200 = vmatprep.subr.mxu0 0.0
        %2201 = vmatpush1.xpose.msra.mxu0 0.0
        %2202 = vmatprep.subr.mxu0 0.0
        %2203 = vmatpush1.xpose.msra.mxu0 0.0
        %2204 = vmatprep.subr.mxu0 0.0
        %2205 = vmatpush1.xpose.msra.mxu0 0.0
        %2206 = vmatprep.subr.mxu0 0.0
        %2207 = vmatpush1.xpose.msra.mxu0 0.0
        %2208 = vmatprep.subr.mxu0 0.0
        %2209 = vmatpush1.xpose.msra.mxu0 0.0
        %2210 = vmatprep.mubr.f32.mxu0 0.0
        %2211 = vmatmul.mubr.f32.gmra.mrb[0].mxu0 %v2142
        %v2212 = vpop.f32.mrb[0].mxu0
        %v2213 = vadd.f32 0.0, %v2212
        %v2214 = vpop.f32.mrb[0].mxu0
        %2215 = vdwg.mxu0
        %v2216 = vmul.f32 %v2213, 0.5
        %v2217 = vsel %vm496, %v2216, -inf
        %2218 = vmax.xlane.f32.xlu0 %v2217
        %v2219 = vpop.xlane.xlu0 %2218
        %v2220 = vsub.f32 %v2216, %v2219
        %v2221 = vmul.f32 %v2220, 1.442695
        %v2222 = vpow.pop %v2221
        %v2223 = vsel %vm496, %v2222, 0.0
        %2224 = vadd.xlane.f32.xlu0 %v2223
        %v2225 = vpop.xlane.xlu0 %2224
        %v2226 = vrcp.pop %v2225
        %v2227 = vmul.f32 %v2222, %v2226
        %2228 = vrot.lane.b32.xlu0 %v414, 68
        %v2229 = vpop.permute.xlu0 %2228
        %v2232 = vsel %vm496, %v2227, 0
        %2234 = vmatprep.subr.mxu0 0.0
        %2235 = vmatpush1.msra.mxu0 %v2229
        %2236 = vmatprep.subr.mxu0 0.0
        %2237 = vmatpush1.msra.mxu0 0.0
        %2238 = vmatprep.subr.mxu0 0.0
        %2239 = vmatpush1.msra.mxu0 0.0
        %2240 = vmatprep.subr.mxu0 0.0
        %2241 = vmatpush1.msra.mxu0 0.0
        %2242 = vmatprep.subr.mxu0 0.0
        %2243 = vmatpush1.msra.mxu0 0.0
        %2244 = vmatprep.subr.mxu0 0.0
        %2245 = vmatpush1.msra.mxu0 0.0
        %2246 = vmatprep.subr.mxu0 0.0
        %2247 = vmatpush1.msra.mxu0 0.0
        %2248 = vmatprep.subr.mxu0 0.0
        %2249 = vmatpush1.msra.mxu0 0.0
        %2250 = vmatprep.subr.mxu0 0.0
        %2251 = vmatpush1.msra.mxu0 0.0
        %2252 = vmatprep.subr.mxu0 0.0
        %2253 = vmatpush1.msra.mxu0 0.0
        %2254 = vmatprep.subr.mxu0 0.0
        %2255 = vmatpush1.msra.mxu0 0.0
        %2256 = vmatprep.subr.mxu0 0.0
        %2257 = vmatpush1.msra.mxu0 0.0
        %2258 = vmatprep.subr.mxu0 0.0
        %2259 = vmatpush1.msra.mxu0 0.0
        %2260 = vmatprep.subr.mxu0 0.0
        %2261 = vmatpush1.msra.mxu0 0.0
        %2262 = vmatprep.subr.mxu0 0.0
        %2263 = vmatpush1.msra.mxu0 0.0
        %2264 = vmatprep.subr.mxu0 0.0
        %2265 = vmatpush1.msra.mxu0 0.0
        %2266 = vmatprep.subr.mxu0 0.0
        %2267 = vmatpush1.msra.mxu0 0.0
        %2268 = vmatprep.subr.mxu0 0.0
        %2269 = vmatpush1.msra.mxu0 0.0
        %2270 = vmatprep.subr.mxu0 0.0
        %2271 = vmatpush1.msra.mxu0 0.0
        %2272 = vmatprep.subr.mxu0 0.0
        %2273 = vmatpush1.msra.mxu0 0.0
        %2274 = vmatprep.subr.mxu0 0.0
        %2275 = vmatpush1.msra.mxu0 0.0
        %2276 = vmatprep.subr.mxu0 0.0
        %2277 = vmatpush1.msra.mxu0 0.0
        %2278 = vmatprep.subr.mxu0 0.0
        %2279 = vmatpush1.msra.mxu0 0.0
        %2280 = vmatprep.subr.mxu0 0.0
        %2281 = vmatpush1.msra.mxu0 0.0
        %2282 = vmatprep.subr.mxu0 0.0
        %2283 = vmatpush1.msra.mxu0 0.0
        %2284 = vmatprep.subr.mxu0 0.0
        %2285 = vmatpush1.msra.mxu0 0.0
        %2286 = vmatprep.subr.mxu0 0.0
        %2287 = vmatpush1.msra.mxu0 0.0
        %2288 = vmatprep.subr.mxu0 0.0
        %2289 = vmatpush1.msra.mxu0 0.0
        %2290 = vmatprep.subr.mxu0 0.0
        %2291 = vmatpush1.msra.mxu0 0.0
        %2292 = vmatprep.subr.mxu0 0.0
        %2293 = vmatpush1.msra.mxu0 0.0
        %2294 = vmatprep.subr.mxu0 0.0
        %2295 = vmatpush1.msra.mxu0 0.0
        %2296 = vmatprep.subr.mxu0 0.0
        %2297 = vmatpush1.msra.mxu0 0.0
        %2298 = vmatprep.mubr.f32.mxu0 0.0
        %2299 = vmatmul.mubr.f32.gmra.mrb[0].mxu0 %v2232
        %v2300 = vpop.f32.mrb[0].mxu0
        %v2301 = vadd.f32 0.0, %v2300
        %v2302 = vpop.f32.mrb[0].mxu0
        %2303 = vdwg.mxu0
        %s2304 = scalar_lea.vmem %s6, 28
        %v2305 = vld [vmem:[%s2304] sm:$0xf]
        %v2307 = vsel %vm418, %v2301, 0
        %v2310 = vsel %vm757, %v2305, 0
        %2312 = vmatprep.subr.mxu0 0.0
        %2313 = vmatpush1.msra.mxu0 %v2310
        %2314 = vmatprep.subr.mxu0 0.0
        %2315 = vmatpush1.msra.mxu0 0.0
        %2316 = vmatprep.subr.mxu0 0.0
        %2317 = vmatpush1.msra.mxu0 0.0
        %2318 = vmatprep.subr.mxu0 0.0
        %2319 = vmatpush1.msra.mxu0 0.0
        %2320 = vmatprep.subr.mxu0 0.0
        %2321 = vmatpush1.msra.mxu0 0.0
        %2322 = vmatprep.subr.mxu0 0.0
        %2323 = vmatpush1.msra.mxu0 0.0
        %2324 = vmatprep.subr.mxu0 0.0
        %2325 = vmatpush1.msra.mxu0 0.0
        %2326 = vmatprep.subr.mxu0 0.0
        %2327 = vmatpush1.msra.mxu0 0.0
        %2328 = vmatprep.subr.mxu0 0.0
        %2329 = vmatpush1.msra.mxu0 0.0
        %2330 = vmatprep.subr.mxu0 0.0
        %2331 = vmatpush1.msra.mxu0 0.0
        %2332 = vmatprep.subr.mxu0 0.0
        %2333 = vmatpush1.msra.mxu0 0.0
        %2334 = vmatprep.subr.mxu0 0.0
        %2335 = vmatpush1.msra.mxu0 0.0
        %2336 = vmatprep.subr.mxu0 0.0
        %2337 = vmatpush1.msra.mxu0 0.0
        %2338 = vmatprep.subr.mxu0 0.0
        %2339 = vmatpush1.msra.mxu0 0.0
        %2340 = vmatprep.subr.mxu0 0.0
        %2341 = vmatpush1.msra.mxu0 0.0
        %2342 = vmatprep.subr.mxu0 0.0
        %2343 = vmatpush1.msra.mxu0 0.0
        %2344 = vmatprep.subr.mxu0 0.0
        %2345 = vmatpush1.msra.mxu0 0.0
        %2346 = vmatprep.subr.mxu0 0.0
        %2347 = vmatpush1.msra.mxu0 0.0
        %2348 = vmatprep.subr.mxu0 0.0
        %2349 = vmatpush1.msra.mxu0 0.0
        %2350 = vmatprep.subr.mxu0 0.0
        %2351 = vmatpush1.msra.mxu0 0.0
        %2352 = vmatprep.subr.mxu0 0.0
        %2353 = vmatpush1.msra.mxu0 0.0
        %2354 = vmatprep.subr.mxu0 0.0
        %2355 = vmatpush1.msra.mxu0 0.0
        %2356 = vmatprep.subr.mxu0 0.0
        %2357 = vmatpush1.msra.mxu0 0.0
        %2358 = vmatprep.subr.mxu0 0.0
        %2359 = vmatpush1.msra.mxu0 0.0
        %2360 = vmatprep.subr.mxu0 0.0
        %2361 = vmatpush1.msra.mxu0 0.0
        %2362 = vmatprep.subr.mxu0 0.0
        %2363 = vmatpush1.msra.mxu0 0.0
        %2364 = vmatprep.subr.mxu0 0.0
        %2365 = vmatpush1.msra.mxu0 0.0
        %2366 = vmatprep.subr.mxu0 0.0
        %2367 = vmatpush1.msra.mxu0 0.0
        %2368 = vmatprep.subr.mxu0 0.0
        %2369 = vmatpush1.msra.mxu0 0.0
        %2370 = vmatprep.subr.mxu0 0.0
        %2371 = vmatpush1.msra.mxu0 0.0
        %2372 = vmatprep.subr.mxu0 0.0
        %2373 = vmatpush1.msra.mxu0 0.0
        %2374 = vmatprep.subr.mxu0 0.0
        %2375 = vmatpush1.msra.mxu0 0.0
        %2376 = vmatprep.mubr.f32.mxu0 0.0
        %2377 = vmatmul.mubr.f32.gmra.mrb[0].mxu0 %v2307
        %v2378 = vpop.f32.mrb[0].mxu0
        %v2379 = vadd.f32 0.0, %v2378
        %v2380 = vpop.f32.mrb[0].mxu0
        %2381 = vdwg.mxu0
        %v2382 = vadd.f32 %v2136, %v2379
        %v2383 = vld [vmem:[%s7] sm:$0x1]
        %v2385 = vlaneseq
        %v2386 = vshrl.u32 %v2385, 7
        %v2387 = vsub.s32 0, %v2386
        %v2388 = vrot.slane %v2383, %v2387
        %v2390 = vadd.f32 %v2382, %v2388
        %2391 = vst.msk [vmem:[%s296] sm:$0xff] %vm302, %v2390
        %s2392 = sand.u32 %s203, 1
        %s2393 = scalar_lea.sflag [#allocation3], %s2392
        %s2394 = sand.u32 %s203, 1
        %s2395 = smul.addr %s2394, 8
        %s2396 = scalar_lea.vmem [#allocation2], %s2395
        // Predicated region
        $region53: #{cross_attention_gather.1} parent=51 // pred_check
          %p2397 = pneg %p213
        $region54: #{cross_attention_gather.1} parent=51 // pred_check_branch
          %2399 = sbr.rel (%p2397) target = $region56
        $region55: #{cross_attention_gather.1} parent=51 // pred_region
          %s2401 = ssub.s32 128, 128
          %2402 = vsyncadd %s2393, %s2401
          %s2403 = smul.addr %s22, 128
          %s2404 = scalar_lea.hbm %s8, %s2403
          %s2406 = sshll.u32 %s2396, 4
          %s2407 = int_to_ptr.vmem [resolvable:$true] %s2406
          %2409 = dma.vmem_to_hbm [thread:$0]  %s2407, 128, %s2404, %s2393
        $region56: #{cross_attention_gather.1} parent=51 // pred_fallthru
          _
      $region52: #{cross_attention_gather.1} parent=5 // pred_fallthru
        _
      %p2410 = scmp.le.s32.totalorder 2, %s17
      // Predicated region
      $region57: #{cross_attention_gather.1} parent=5 // pred_check
        %p2411 = pneg %p2410
      $region58: #{cross_attention_gather.1} parent=5 // pred_check_branch
        %2413 = sbr.rel (%p2411) target = $region60
      $region59: #{cross_attention_gather.1} parent=5 // pred_region
        %s2414 = ssub.s32 %s17, 2
        // Predicated region
        $region61: #{cross_attention_gather.1} parent=59 // pred_check
          %p2415 = pneg %p219
        $region62: #{cross_attention_gather.1} parent=59 // pred_check_branch
          %2417 = sbr.rel (%p2415) target = $region64
        $region63: #{cross_attention_gather.1} parent=59 // pred_region
          %s2418 = sand.u32 %s204, 1
          %s2419 = scalar_lea.sflag [#allocation3], %s2418
          %s2420 = sand.u32 %s204, 1
          %s2421 = smul.addr %s2420, 8
          %s2422 = scalar_lea.vmem [#allocation2], %s2421
          %2423 = dma.done %s2419, 128
        $region64: #{cross_attention_gather.1} parent=59 // pred_fallthru
          _
      $region60: #{cross_attention_gather.1} parent=5 // pred_fallthru
        _
    $region6: #{cross_attention_gather.1} parent=1 // loop_footer
      %s21 = sadd.s32 1, %s17
    $region7: #{cross_attention_gather.1} parent=1 // loop_footer_branch
      %16 = sbr.rel target = $region3
    $region8: #{cross_attention_gather.1} parent=1 // loop_exit
      _
    %2424 = vsyncpa [#allocation3], 1
    %s2425 = scalar_lea.sflag [#allocation3], 1
    %2426 = vsyncpa %s2425, 1

</llo_original>
